<compile_context>
chip_gen: v6e
topology: v6e:2x2x1
jax: 0.10.0
libtpu: 0.0.40
codegen_flags: <defaults>
</compile_context>

<pallas_src>
import jax
import jax.numpy as jnp
from jax import lax
from jax.experimental import pallas as pl
from jax.experimental.pallas import tpu as pltpu


def _encoder_pooler_kernel(x_ref, cnt_ref, w_ref, b_ref, o_ref, acc_ref):
    """One (batch-tile i, seq-tile k) grid step.

    x_ref   : [Bt, Tt, H]  hidden-state tile (streamed; bf16 or f32)
    cnt_ref : [Bt, 1]      per-row valid-token counts (resident)
    w_ref   : [H, O]       dense weight (resident; torch weight transposed)
    b_ref   : [1, O] f32   dense bias (resident)
    o_ref   : [Bt, O]      output tile (revisited across the seq axis)
    acc_ref : [Bt, H] f32  running token-sum accumulator (VMEM scratch)
    """
    k = pl.program_id(1)
    nk = pl.num_programs(1)

    @pl.when(k == 0)
    def _init():
        acc_ref[...] = jnp.zeros_like(acc_ref)

    # ---- streamed phase: accumulate (unmasked) token sums for this seq tile ----
    x = x_ref[...]                                     # [Bt, Tt, H], native dtype
    if x.dtype == jnp.float32:
        # f32 stream: plain VALU reduction (no upcast temporary exists).
        acc_ref[...] += jnp.sum(x, axis=1)
    else:
        # bf16 stream: batched ones-matmul on the otherwise-idle MXU with f32
        # accumulation. Avoids materializing an f32 copy of the tile and keeps
        # the streaming loop DMA-bound (VALU is the binding slot on v7x).
        ones_row = jnp.ones((x.shape[0], 1, x.shape[1]), dtype=x.dtype)
        tok_sum = lax.dot_general(
            ones_row, x,
            dimension_numbers=(((2,), (1,)), ((0,), (0,))),
            preferred_element_type=jnp.float32)        # [Bt, 1, H] f32
        acc_ref[...] += jnp.reshape(tok_sum, acc_ref.shape)

    # ---- epilogue: mean, dense, tanh, L2 norm (once per batch tile) ----
    @pl.when(k == nk - 1)
    def _epilogue():
        cnt = cnt_ref[...]                                           # [Bt, 1] f32
        # Guarded: same forward output as (sum / cnt) then where(cnt>0,...,0),
        # but never produces inf/nan.
        inv_cnt = pl.reciprocal(jnp.maximum(cnt, 1.0), approx=False)
        pooled = jnp.where(cnt > 0, acc_ref[...] * inv_cnt, 0.0)     # [Bt, H] f32

        w = w_ref[...]
        if w.dtype == jnp.float32:
            # Match the f32 reference GEMM (off the hot path; once per batch tile).
            y = jnp.dot(pooled, w, precision=lax.Precision.HIGHEST,
                        preferred_element_type=jnp.float32)
        else:
            # Sub-f32 weights: feed the MXU natively, no f32 upcast of the weight.
            y = jnp.dot(pooled.astype(w.dtype), w,
                        preferred_element_type=jnp.float32)
        y = y + b_ref[...]                                           # [Bt, O]
        y = jnp.tanh(y)

        # F.normalize(p=2, eps=1e-12): y / max(||y||, 1e-12) == y * rsqrt(max(||y||^2, 1e-24))
        ssq = jnp.sum(y * y, axis=-1, keepdims=True)
        y = y * lax.rsqrt(jnp.maximum(ssq, 1e-24))

        o_ref[...] = y.astype(o_ref.dtype)


def _round_up(x, m):
    return (x + m - 1) // m * m


def _pick_batch_tile(B):
    """Largest multiple-of-8 divisor of B (capped at 256), preferring >= 2 batch
    tiles so both v7x TensorCores get work; falls back to the whole batch."""
    if B <= 8:
        return B

    def _search(need_multi):
        best = None
        bt = 8
        while bt <= min(B, 256):
            if B % bt == 0 and (not need_multi or B // bt >= 2):
                best = bt
            bt += 8
        return best

    return _search(True) or _search(False) or B


def _pick_seq_tile(T, bt, H, itemsize, target_bytes):
    """Multiple-of-8 sequence tile whose [bt, tt, H] buffer fits in target_bytes.

    The wrapper zero-pads T up to a multiple of the returned tile when needed.
    """
    bytes_per_tok = max(1, bt * H * itemsize)
    max_tt = max(8, (target_bytes // bytes_per_tok) // 8 * 8)
    t8 = _round_up(max(T, 1), 8)
    if t8 <= max_tt:
        return t8                          # whole (padded-to-x8) sequence in one tile
    # Prefer an exact multiple-of-8 divisor of T (no padding) if it is within 2x of
    # the budgeted tile; otherwise take the budget tile and pad.
    best_div, d = None, 8
    while d <= max_tt:
        if T % d == 0:
            best_div = d
        d += 8
    if best_div is not None and 2 * best_div >= max_tt:
        return best_div
    return max_tt


def _vmem_budget():
    """(physical_vmem, usable_cap, per-stream-buffer cap) for this TPU generation."""
    try:
        phys = int(pltpu.get_tpu_info().vmem_capacity_bytes)
    except Exception:
        phys = 64 * 1024 * 1024            # conservative fallback (v7x per-TC VMEM)
    cap = int(phys * 0.8)                  # headroom for compiler-internal scratch
    # ~6 MiB per streamed buffer on 64 MiB parts (v7x), ~16 MiB on 128 MiB parts (v5e/v6e).
    per_buf = 6 * 1024 * 1024 if phys <= 64 * 1024 * 1024 else 16 * 1024 * 1024
    return phys, cap, per_buf


def encoder_pooler(hidden_states, attention_mask, weight, bias,
                   *, block_b=None, block_t=None, out_dtype=jnp.float32,
                   stream_dtype=None):
    """EncoderPooler forward (agg='mean', dense, tanh, L2 norm).

    hidden_states : [B, T, H]  (bf16 recommended on the production path -- the kernel
                               is HBM-read bound and bf16 halves traffic; accumulation
                               is f32 either way)
    attention_mask: [B, T]
    weight        : [H, O]     (torch nn.Linear weight, transposed)
    bias          : [O]
    stream_dtype  : optional cast applied before streaming (only pays off if the
                    cast fuses upstream; otherwise it adds an HBM pass).
    returns       : [B, O] out_dtype
    """
    B, T, H = hidden_states.shape
    O = weight.shape[1]

    x = hidden_states if stream_dtype is None else hidden_states.astype(stream_dtype)
    itemsize = x.dtype.itemsize
    out_itemsize = jnp.dtype(out_dtype).itemsize

    # ---- batch tile -------------------------------------------------------------
    if block_b is not None:
        bt = int(block_b)
        if B % bt != 0 or (bt % 8 != 0 and bt != B):
            bt = B
    else:
        bt = _pick_batch_tile(B)
    nb = B // bt

    # ---- generation-aware VMEM budget --------------------------------------------
    _, vmem_cap, per_buf_cap = _vmem_budget()
    # Resident operands (constant index_maps) are still double-buffered by the
    # default pipeline: count both copies.
    resident_bytes = 2 * (H * O * weight.dtype.itemsize + O * 4 + bt * 4)
    fixed_bytes = resident_bytes + bt * H * 4 + 2 * bt * O * out_itemsize
    avail = vmem_cap - fixed_bytes - 2 * 1024 * 1024
    target_bytes = max(512 * 1024, min(per_buf_cap, avail // 2))

    # ---- sequence tile (+ zero padding for awkward T) -----------------------------
    if block_t is not None:
        tt = min(_round_up(int(block_t), 8), _round_up(T, 8))
    else:
        tt = _pick_seq_tile(T, bt, H, itemsize, target_bytes)
    tt = max(8, tt)
    t_pad = _round_up(T, tt)
    if t_pad != T:
        # Exact: the token-sum numerator is unmasked (matching _MeanAgg) and the
        # zero-padded tail contributes nothing; cnt uses the unpadded mask below.
        x = jnp.pad(x, ((0, 0), (0, t_pad - T), (0, 0)))
    nt = t_pad // tt

    # Mask collapses to a per-row token count -> no [B, T] mask DMA in the kernel.
    cnt = jnp.sum(attention_mask.astype(jnp.float32), axis=-1, keepdims=True)   # [B, 1]
    bias2d = bias.astype(jnp.float32).reshape(1, O)

    vmem_need = fixed_bytes + 2 * bt * tt * H * itemsize
    vmem_limit = int(min(vmem_cap, max(2 * vmem_need, 32 * 1024 * 1024)))
    vmem_limit = max(vmem_limit, vmem_need + 2 * 1024 * 1024)

    grid_spec = pltpu.PrefetchScalarGridSpec(
        num_scalar_prefetch=0,
        grid=(nb, nt),                                            # reduction axis last
        in_specs=[
            pl.BlockSpec((bt, tt, H), lambda i, k: (i, k, 0)),    # streamed hidden states
            pl.BlockSpec((bt, 1), lambda i, k: (i, 0)),           # token counts (resident per i)
            pl.BlockSpec((H, O), lambda i, k: (0, 0)),            # dense weight (resident)
            pl.BlockSpec((1, O), lambda i, k: (0, 0)),            # dense bias (resident)
        ],
        out_specs=pl.BlockSpec((bt, O), lambda i, k: (i, 0)),     # revisited across k
        scratch_shapes=[pltpu.VMEM((bt, H), jnp.float32)],
    )

    return pl.pallas_call(
        _encoder_pooler_kernel,
        out_shape=jax.ShapeDtypeStruct((B, O), out_dtype),
        grid_spec=grid_spec,
        compiler_params=pltpu.CompilerParams(
            dimension_semantics=("parallel", "arbitrary"),        # batch tiles shard across TCs
            vmem_limit_bytes=int(vmem_limit),
        ),
    )(x, cnt, weight, bias2d)


def _reference(hidden_states, attention_mask, weight, bias):
    x = hidden_states.astype(jnp.float32)
    m = attention_mask.astype(jnp.float32)
    sum_mask = jnp.sum(m, axis=-1, keepdims=True)
    x_mean = jnp.sum(x, axis=-2) / jnp.maximum(sum_mask, 1.0)
    pooled = jnp.where(sum_mask > 0, x_mean, 0.0)
    y = jnp.dot(pooled, weight.astype(jnp.float32),
                precision=lax.Precision.HIGHEST,
                preferred_element_type=jnp.float32) + bias
    y = jnp.tanh(y)
    ssq = jnp.sum(y * y, axis=-1, keepdims=True)
    return y * lax.rsqrt(jnp.maximum(ssq, 1e-24))


if __name__ == "__main__":
    def run_case(B, T, H, O, block_b=None, block_t=None, x_dtype=jnp.bfloat16, seed=0):
        key = jax.random.PRNGKey(seed)
        kx, km, kw, kb = jax.random.split(key, 4)
        hidden_states = jax.random.normal(kx, (B, T, H), jnp.float32).astype(x_dtype)
        # Random valid lengths in [T//4, T]; one fully-padded row hits the cnt==0 guard.
        lengths = jax.random.randint(km, (B,), max(1, T // 4), T + 1)
        attention_mask = (jnp.arange(T)[None, :] < lengths[:, None]).astype(jnp.float32)
        attention_mask = attention_mask.at[min(1, B - 1)].set(0.0)
        # Deterministic nn.Linear-style init; weight stored [H, O] (torch weight.T).
        bound = 1.0 / (H ** 0.5)
        weight = jax.random.uniform(kw, (H, O), jnp.float32, -bound, bound)
        bias = jax.random.uniform(kb, (O,), jnp.float32, -bound, bound)

        out = encoder_pooler(hidden_states, attention_mask, weight, bias,
                             block_b=block_b, block_t=block_t)
        out = jax.block_until_ready(out)
        ref = _reference(hidden_states, attention_mask, weight, bias)
        assert out.shape == (B, O)
        err = float(jnp.max(jnp.abs(out - ref)))
        assert bool(jnp.allclose(out, ref, atol=1e-4, rtol=1e-4)), f"mismatch, max abs err {err}"

    # Explicit small tiles: 2 batch-tile x 4 seq-tile grid, exercises the k==0 / k==last
    # accumulator phases and the bf16 MXU token-sum path.
    run_case(16, 64, 128, 128, block_b=8, block_t=16)
    # Auto, generation-aware tiling (single seq tile here; both pl.when phases on one step).
    run_case(16, 64, 128, 128)
    # Awkward T (72 with tt=16 -> zero-padded to 80) and an f32 hidden-state stream.
    run_case(16, 72, 128, 128, block_t=16, x_dtype=jnp.float32)

    print("KERNEL_OK")
</pallas_src>

<mosaic_0001>
module attributes {stable_mosaic.version = 11 : i64} {
  func.func @_encoder_pooler_kernel(%arg0: i32, %arg1: i32, %arg2: memref<8x16x128xbf16, #tpu.memory_space<vmem>>, %arg3: memref<8x1xf32, #tpu.memory_space<vmem>>, %arg4: memref<128x128xf32, #tpu.memory_space<vmem>>, %arg5: memref<1x128xf32, #tpu.memory_space<vmem>>, %arg6: memref<8x128xf32, #tpu.memory_space<vmem>>, %arg7: memref<8x128xf32, #tpu.memory_space<vmem>>) attributes {dimension_semantics = [#tpu.dimension_semantics<parallel>, #tpu.dimension_semantics<arbitrary>], iteration_bounds = array<i64: 2, 4>, scalar_prefetch = 0 : i64, scratch_operands = 1 : i64, tpu.core_type = #tpu.core_type<tc>, window_params = [{transform_indices = @transform_0, window_bounds = array<i64: 8, 16, 128>}, {transform_indices = @transform_1, window_bounds = array<i64: 8, 1>}, {pipeline_mode = #tpu.pipeline_mode<synchronous>, transform_indices = @transform_2, window_bounds = array<i64: 128, 128>}, {pipeline_mode = #tpu.pipeline_mode<synchronous>, transform_indices = @transform_3, window_bounds = array<i64: 1, 128>}, {transform_indices = @transform_4, window_bounds = array<i64: 8, 128>}]} {
    %c0_i32 = arith.constant 0 : i32
    %0 = arith.cmpi eq, %arg1, %c0_i32 : i32
    %1 = arith.extui %0 : i1 to i32
    %c0_i32_0 = arith.constant 0 : i32
    %2 = arith.cmpi ne, %1, %c0_i32_0 : i32
    scf.if %2 {
      %cst_9 = arith.constant 0.000000e+00 : f32
      %13 = vector.broadcast %cst_9 : f32 to vector<8x128xf32>
      %c0_10 = arith.constant 0 : index
      %c0_11 = arith.constant 0 : index
      %14 = vector.load %arg7[%c0_10, %c0_11] : memref<8x128xf32, #tpu.memory_space<vmem>>, vector<8x128xf32>
      tpu.vector_store %arg7[%c0_10, %c0_11], %13 {strides = array<i32>} : memref<8x128xf32, #tpu.memory_space<vmem>>, vector<8x128xf32>,
    } else {
    }
    %c0 = arith.constant 0 : index
    %c0_1 = arith.constant 0 : index
    %c0_2 = arith.constant 0 : index
    %3 = vector.load %arg2[%c0, %c0_1, %c0_2] : memref<8x16x128xbf16, #tpu.memory_space<vmem>>, vector<8x16x128xbf16>
    %cst = arith.constant 1.000000e+00 : bf16
    %4 = vector.broadcast %cst : bf16 to vector<8x1x16xbf16>
    %cst_3 = arith.constant dense<0.000000e+00> : vector<8x1x128xf32>
    %5 = tpu.matmul %4, %3, %cst_3 {dimension_numbers = #tpu.dot_dimension_numbers<[2], [1], [1], [2], [0, 0, 0, 1, 1, 2], [0], [0]>} : vector<8x1x16xbf16>, vector<8x16x128xbf16>, vector<8x1x128xf32> -> vector<8x1x128xf32>
    %c0_4 = arith.constant 0 : index
    %c0_5 = arith.constant 0 : index
    %6 = vector.load %arg7[%c0_4, %c0_5] : memref<8x128xf32, #tpu.memory_space<vmem>>, vector<8x128xf32>
    %7 = vector.shape_cast %5 : vector<8x1x128xf32> to vector<8x128xf32>
    %8 = arith.addf %6, %7 : vector<8x128xf32>
    %c0_6 = arith.constant 0 : index
    %c0_7 = arith.constant 0 : index
    %9 = vector.load %arg7[%c0_6, %c0_7] : memref<8x128xf32, #tpu.memory_space<vmem>>, vector<8x128xf32>
    tpu.vector_store %arg7[%c0_6, %c0_7], %8 {strides = array<i32>} : memref<8x128xf32, #tpu.memory_space<vmem>>, vector<8x128xf32>,
    %c3_i32 = arith.constant 3 : i32
    %10 = arith.cmpi eq, %arg1, %c3_i32 : i32
    %11 = arith.extui %10 : i1 to i32
    %c0_i32_8 = arith.constant 0 : i32
    %12 = arith.cmpi ne, %11, %c0_i32_8 : i32
    scf.if %12 {
      %c0_9 = arith.constant 0 : index
      %c0_10 = arith.constant 0 : index
      %13 = vector.load %arg3[%c0_9, %c0_10] : memref<8x1xf32, #tpu.memory_space<vmem>>, vector<8x1xf32>
      %cst_11 = arith.constant 1.000000e+00 : f32
      %14 = vector.broadcast %cst_11 : f32 to vector<8x1xf32>
      %15 = arith.maximumf %13, %14 : vector<8x1xf32>
      %16 = tpu.reciprocal %15 : vector<8x1xf32> -> vector<8x1xf32>
      %cst_12 = arith.constant 0.000000e+00 : f32
      %17 = vector.broadcast %cst_12 : f32 to vector<8x1xf32>
      %18 = arith.cmpf ogt, %13, %17 : vector<8x1xf32>
      %c0_13 = arith.constant 0 : index
      %c0_14 = arith.constant 0 : index
      %19 = vector.load %arg7[%c0_13, %c0_14] : memref<8x128xf32, #tpu.memory_space<vmem>>, vector<8x128xf32>
      %20 = vector.broadcast %16 : vector<8x1xf32> to vector<8x128xf32>
      %21 = arith.mulf %19, %20 : vector<8x128xf32>
      %cst_15 = arith.constant 0.000000e+00 : f32
      %22 = vector.shape_cast %18 : vector<8x1xi1> to vector<8x1xi1>
      %23 = vector.broadcast %22 : vector<8x1xi1> to vector<8x128xi1>
      %24 = vector.broadcast %cst_15 : f32 to vector<8x128xf32>
      %25 = arith.select %23, %21, %24 : vector<8x128xi1>, vector<8x128xf32>
      %c0_16 = arith.constant 0 : index
      %c0_17 = arith.constant 0 : index
      %26 = vector.load %arg4[%c0_16, %c0_17] : memref<128x128xf32, #tpu.memory_space<vmem>>, vector<128x128xf32>
      %cst_18 = arith.constant dense<0.000000e+00> : vector<8x128xf32>
      %27 = tpu.matmul %25, %26, %cst_18 {dimension_numbers = #tpu.dot_dimension_numbers<[1], [0], [0], [1], [0, 0, 1, 1], [], []>, precision = #tpu.contract_precision<fp32>} : vector<8x128xf32>, vector<128x128xf32>, vector<8x128xf32> -> vector<8x128xf32>
      %c0_19 = arith.constant 0 : index
      %c0_20 = arith.constant 0 : index
      %28 = vector.load %arg5[%c0_19, %c0_20] : memref<1x128xf32, #tpu.memory_space<vmem>>, vector<1x128xf32>
      %29 = vector.broadcast %28 : vector<1x128xf32> to vector<8x128xf32>
      %30 = arith.addf %27, %29 : vector<8x128xf32>
      %31 = math.tanh %30 : vector<8x128xf32>
      %32 = arith.mulf %31, %31 : vector<8x128xf32>
      %cst_21 = arith.constant dense<0.000000e+00> : vector<8xf32>
      %33 = vector.multi_reduction <add>, %32, %cst_21 [1] : vector<8x128xf32> to vector<8xf32>
      %34 = vector.shape_cast %33 : vector<8xf32> to vector<8x1xf32>
      %cst_22 = arith.constant 1.000000e-24 : f32
      %35 = vector.broadcast %cst_22 : f32 to vector<8x1xf32>
      %36 = arith.maximumf %34, %35 : vector<8x1xf32>
      %37 = math.rsqrt %36 : vector<8x1xf32>
      %38 = vector.broadcast %37 : vector<8x1xf32> to vector<8x128xf32>
      %39 = arith.mulf %31, %38 : vector<8x128xf32>
      %c0_23 = arith.constant 0 : index
      %c0_24 = arith.constant 0 : index
      %40 = vector.load %arg6[%c0_23, %c0_24] : memref<8x128xf32, #tpu.memory_space<vmem>>, vector<8x128xf32>
      tpu.vector_store %arg6[%c0_23, %c0_24], %39 {strides = array<i32>} : memref<8x128xf32, #tpu.memory_space<vmem>>, vector<8x128xf32>,
    } else {
    }
    return
  }
  func.func @transform_0(%arg0: i32, %arg1: i32) -> (i32, i32, i32) {
    %c0_i32 = arith.constant 0 : i32
    %c0_i32_0 = arith.constant 0 : i32
    return %arg0, %arg1, %c0_i32 : i32, i32, i32
  }
  func.func @transform_1(%arg0: i32, %arg1: i32) -> (i32, i32) {
    %c0_i32 = arith.constant 0 : i32
    %c0_i32_0 = arith.constant 0 : i32
    return %arg0, %c0_i32 : i32, i32
  }
  func.func @transform_2(%arg0: i32, %arg1: i32) -> (i32, i32) {
    %c0_i32 = arith.constant 0 : i32
    %c0_i32_0 = arith.constant 0 : i32
    %c0_i32_1 = arith.constant 0 : i32
    return %c0_i32, %c0_i32_0 : i32, i32
  }
  func.func @transform_3(%arg0: i32, %arg1: i32) -> (i32, i32) {
    %c0_i32 = arith.constant 0 : i32
    %c0_i32_0 = arith.constant 0 : i32
    %c0_i32_1 = arith.constant 0 : i32
    return %c0_i32, %c0_i32_0 : i32, i32
  }
  func.func @transform_4(%arg0: i32, %arg1: i32) -> (i32, i32) {
    %c0_i32 = arith.constant 0 : i32
    %c0_i32_0 = arith.constant 0 : i32
    return %arg0, %c0_i32 : i32, i32
  }
}

</mosaic_0001>

<llo_original>
// kernel: tpu_custom_call.1
$region0: #{tpu_custom_call.1}
  #allocation0 [shape = 'u32[]', space=smem, size = 0x4, offset = 0x4, fixed_abs, tag = 'smem constant byte address 0x4 - core index']
  #allocation1 [shape = 'u32[144,128]{1,0:T(1,128)}', space=vmem, size = 0x12000, scoped, tag = 'internal scratch']
  #allocation2 [shape = 'f32[8,128]{1,0:T(8,128)}', space=vmem, size = 0x1000, scoped, tag = 'scratch operand']
  #allocation9 [shape = 's32[]', space=sflag, size = 0x4, offset = 0, fixed_abs, tag = 'sflag constant byte address 0x0 - dummy sync flag']
  %s0 = inlined_call_operand.hbm [shape: bf16[16,64,128], index: 0, kind: input, shape index: {}]
  %s1 = inlined_call_operand.vmem [shape: f32[16,1], index: 1, kind: input, shape index: {}]
  %s2 = inlined_call_operand.hbm [shape: f32[128,128], index: 2, kind: input, shape index: {}]
  %s3 = inlined_call_operand.vmem [shape: f32[1,128], index: 3, kind: input, shape index: {}]
  %s4 = inlined_call_operand.hbm [shape: f32[16,128], index: 4, kind: output, shape index: {}]
  %s5 = sld [smem:[#allocation0]]
  $region65: #{tpu_custom_call.1} parent=0
    _
  %s7 = ssub.s32 1, %s5
  %s8 = scalar_select 0, %s7, %s5
  $region1: #{tpu_custom_call.1} parent=0
    #allocation3 [shape = 'u8[65536]{0}', space=vmem, size = 0x10000, scoped, tag = 'input window, operand 0']
    #allocation4 [shape = 's32[2]{0}', space=sflag, size = 0x8, scoped, tag = 'scoped memory for tpu_custom_call.1']
    #allocation5 [shape = 's32[2]{0}', space=sflag, size = 0x8, scoped, tag = 'scoped memory for tpu_custom_call.1']
    #allocation6 [shape = 'u8[65536]{0}', space=vmem, size = 0x10000, scoped, tag = 'input window, operand 2, single buffered']
    #allocation7 [shape = 's32[1]{0}', space=sflag, size = 0x4, scoped, tag = 'scoped memory for tpu_custom_call.1']
    #allocation8 [shape = 'u8[8192]{0}', space=vmem, size = 0x2000, scoped, tag = 'output window, operand 0']
    %9 = vsyncpa [#allocation4], 0
    %s10 = scalar_lea.sflag [#allocation4], 1
    %11 = vsyncpa %s10, 0
    %12 = vsyncpa [#allocation7], 0
    %13 = vsyncpa [#allocation5], 0
    %s14 = scalar_lea.sflag [#allocation5], 1
    %15 = vsyncpa %s14, 0
    loop: start=0, step=1, limit=10
    $region2: #{tpu_custom_call.1} parent=1 // loop_pre_header
      _
    $region3: #{tpu_custom_call.1} parent=1 // loop_header
      %s17 = sphi 0, %s21
      %p18 = scmp.ge.s32.totalorder %s17, 10
      %s24 = sphi 0, %s36
      %s25 = sphi 0, %s32
      %s26 = sphi 0, %s24
      %s27 = sphi 0, %s25
      %s28 = sphi 0, %s26
      %s29 = sphi 0, %s27
      %s41 = sphi 0, %s43
      %s44 = sphi 0, %s41
      %s45 = sphi 0, %s44
      %s61 = sphi 0, %s45
      %s67 = sphi 0, %s69
      %s70 = sphi 0, %s67
      %s71 = sphi 0, %s70
      %s87 = sphi 0, %s71
      %s91 = sphi 0, %s91
      %s93 = sphi 0, %s91
      %s94 = sphi 0, %s93
      %s108 = sphi 0, %s94
      %s112 = sphi 0, %s112
      %s114 = sphi 0, %s112
      %s115 = sphi 0, %s114
      %s129 = sphi 0, %s115
      %s135 = sphi 0, %s137
      %s138 = sphi 0, %s135
      %s139 = sphi 0, %s138
      %s155 = sphi 0, %s139
    $region4: #{tpu_custom_call.1} parent=1 // loop_header_branch
      %20 = sbr.rel (%p18) target = $region8
    $region5: #{tpu_custom_call.1} parent=1 // loop_body
      %s22 = ssub.s32 %s17, 1
      %s23 = ssub.s32 %s17, 2
      %s30 = sadd.s32 1, %s25
      %p31 = scmp.ge.s32.totalorder %s30, 4
      %s32 = scalar_select %p31, 0, %s30
      %s33 = sadd.s32 1, %s24
      %s34 = scalar_select %p31, %s33, %s24
      %p35 = scmp.ge.s32.totalorder %s34, 2
      %s36 = scalar_select %p35, 0, %s34
      %s37 = ssub.s32 %s24, %s36
      %s38 = ssub.s32 %s25, %s32
      %s39 = sor.u32 %s37, %s38
      %p40 = scmp.eq.s32.totalorder %s39, 0
      %s42 = sadd.s32 %s41, 1
      %s43 = scalar_select %p40, %s41, %s42
      %p46 = pneg %p40
      %p47 = scmp.eq.s32.totalorder %s17, 7
      %p48 = por %p46, %p47
      %p49 = scmp.ne.s32.totalorder %s41, %s44
      %p50 = scmp.eq.s32.totalorder %s17, 0
      %p51 = por %p49, %p50
      %p52 = scmp.ne.s32.totalorder %s41, %s44
      %p53 = scmp.eq.s32.totalorder %s22, 7
      %p54 = por %p52, %p53
      %p55 = scmp.ne.s32.totalorder %s44, %s45
      %p56 = scmp.eq.s32.totalorder %s22, 0
      %p57 = por %p55, %p56
      %p58 = scmp.ne.s32.totalorder %s44, %s45
      %p59 = scmp.eq.s32.totalorder %s23, 7
      %p60 = por %p58, %p59
      %p62 = scmp.ne.s32.totalorder %s45, %s61
      %p63 = scmp.eq.s32.totalorder %s23, 0
      %p64 = por %p62, %p63
      %s65 = ssub.s32 %s24, %s36
      %p66 = scmp.eq.s32.totalorder %s65, 0
      %s68 = sadd.s32 %s67, 1
      %s69 = scalar_select %p66, %s67, %s68
      %p72 = pneg %p66
      %p73 = scmp.eq.s32.totalorder %s17, 7
      %p74 = por %p72, %p73
      %p75 = scmp.ne.s32.totalorder %s67, %s70
      %p76 = scmp.eq.s32.totalorder %s17, 0
      %p77 = por %p75, %p76
      %p78 = scmp.ne.s32.totalorder %s67, %s70
      %p79 = scmp.eq.s32.totalorder %s22, 7
      %p80 = por %p78, %p79
      %p81 = scmp.ne.s32.totalorder %s70, %s71
      %p82 = scmp.eq.s32.totalorder %s22, 0
      %p83 = por %p81, %p82
      %p84 = scmp.ne.s32.totalorder %s70, %s71
      %p85 = scmp.eq.s32.totalorder %s23, 7
      %p86 = por %p84, %p85
      %p88 = scmp.ne.s32.totalorder %s71, %s87
      %p89 = scmp.eq.s32.totalorder %s23, 0
      %p90 = por %p88, %p89
      %s92 = sadd.s32 %s91, 1
      %p95 = scmp.eq.s32.totalorder %s17, 7
      %p96 = scmp.ne.s32.totalorder %s91, %s93
      %p97 = scmp.eq.s32.totalorder %s17, 0
      %p98 = por %p96, %p97
      %p99 = scmp.ne.s32.totalorder %s91, %s93
      %p100 = scmp.eq.s32.totalorder %s22, 7
      %p101 = por %p99, %p100
      %p102 = scmp.ne.s32.totalorder %s93, %s94
      %p103 = scmp.eq.s32.totalorder %s22, 0
      %p104 = por %p102, %p103
      %p105 = scmp.ne.s32.totalorder %s93, %s94
      %p106 = scmp.eq.s32.totalorder %s23, 7
      %p107 = por %p105, %p106
      %p109 = scmp.ne.s32.totalorder %s94, %s108
      %p110 = scmp.eq.s32.totalorder %s23, 0
      %p111 = por %p109, %p110
      %s113 = sadd.s32 %s112, 1
      %p116 = scmp.eq.s32.totalorder %s17, 7
      %p117 = scmp.ne.s32.totalorder %s112, %s114
      %p118 = scmp.eq.s32.totalorder %s17, 0
      %p119 = por %p117, %p118
      %p120 = scmp.ne.s32.totalorder %s112, %s114
      %p121 = scmp.eq.s32.totalorder %s22, 7
      %p122 = por %p120, %p121
      %p123 = scmp.ne.s32.totalorder %s114, %s115
      %p124 = scmp.eq.s32.totalorder %s22, 0
      %p125 = por %p123, %p124
      %p126 = scmp.ne.s32.totalorder %s114, %s115
      %p127 = scmp.eq.s32.totalorder %s23, 7
      %p128 = por %p126, %p127
      %p130 = scmp.ne.s32.totalorder %s115, %s129
      %p131 = scmp.eq.s32.totalorder %s23, 0
      %p132 = por %p130, %p131
      %s133 = ssub.s32 %s24, %s36
      %p134 = scmp.eq.s32.totalorder %s133, 0
      %s136 = sadd.s32 %s135, 1
      %s137 = scalar_select %p134, %s135, %s136
      %p140 = pneg %p134
      %p141 = scmp.eq.s32.totalorder %s17, 7
      %p142 = por %p140, %p141
      %p143 = scmp.ne.s32.totalorder %s135, %s138
      %p144 = scmp.eq.s32.totalorder %s17, 0
      %p145 = por %p143, %p144
      %p146 = scmp.ne.s32.totalorder %s135, %s138
      %p147 = scmp.eq.s32.totalorder %s22, 7
      %p148 = por %p146, %p147
      %p149 = scmp.ne.s32.totalorder %s138, %s139
      %p150 = scmp.eq.s32.totalorder %s22, 0
      %p151 = por %p149, %p150
      %p152 = scmp.ne.s32.totalorder %s138, %s139
      %p153 = scmp.eq.s32.totalorder %s23, 7
      %p154 = por %p152, %p153
      %p156 = scmp.ne.s32.totalorder %s139, %s155
      %p157 = scmp.eq.s32.totalorder %s23, 0
      %p158 = por %p156, %p157
      %p159 = scmp.le.s32.totalorder 1, %s17
      %p160 = scmp.lt.s32.totalorder %s17, 9
      %p161 = pnand %p159, %p160
      %p162 = pneg %p161
      // Predicated region
      $region9: #{tpu_custom_call.1} parent=5 // pred_check
        _
      $region10: #{tpu_custom_call.1} parent=5 // pred_check_branch
        %164 = sbr.rel (%p161) target = $region12
      $region11: #{tpu_custom_call.1} parent=5 // pred_region
        %s165 = ssub.s32 %s17, 1
        // Predicated region
        $region13: #{tpu_custom_call.1} parent=11 // pred_check
          %p166 = pneg %p104
        $region14: #{tpu_custom_call.1} parent=11 // pred_check_branch
          %168 = sbr.rel (%p166) target = $region16
        $region15: #{tpu_custom_call.1} parent=11 // pred_region
          %s170 = ssub.s32 2048, 2048
          %171 = vsyncadd [#allocation7], %s170
          %s172 = sshll.u32 [#allocation6], 4
          %s173 = int_to_ptr.vmem [resolvable:$true] %s172
          %178 = dma.hbm_to_vmem [thread:$0]  %s2, 2048, %s173, [#allocation7], 128, 128, 8
        $region16: #{tpu_custom_call.1} parent=11 // pred_fallthru
          _
        // Predicated region
        $region17: #{tpu_custom_call.1} parent=11 // pred_check
          %p179 = pneg %p125
        $region18: #{tpu_custom_call.1} parent=11 // pred_check_branch
          %181 = sbr.rel (%p179) target = $region20
        $region19: #{tpu_custom_call.1} parent=11 // pred_region
          _
        $region20: #{tpu_custom_call.1} parent=11 // pred_fallthru
          _
      $region12: #{tpu_custom_call.1} parent=5 // pred_fallthru
        _
      %p182 = scmp.lt.s32.totalorder %s17, 8
      // Predicated region
      $region21: #{tpu_custom_call.1} parent=5 // pred_check
        %p183 = pneg %p182
      $region22: #{tpu_custom_call.1} parent=5 // pred_check_branch
        %185 = sbr.rel (%p183) target = $region24
      $region23: #{tpu_custom_call.1} parent=5 // pred_region
        // Predicated region
        $region25: #{tpu_custom_call.1} parent=23 // pred_check
          %p186 = pneg %p51
        $region26: #{tpu_custom_call.1} parent=23 // pred_check_branch
          %188 = sbr.rel (%p186) target = $region28
        $region27: #{tpu_custom_call.1} parent=23 // pred_region
          #allocation10 [shape = 'u32[6]{0}', space=smem, size = 0x18, scoped, tag = 'DMA stride descriptor']
          %s189 = sand.u32 %s41, 1
          %s190 = scalar_lea.sflag [#allocation4], %s189
          %s191 = sand.u32 %s41, 1
          %s192 = smul.addr %s191, 64
          %s193 = scalar_lea.vmem [#allocation3], %s192
          %s194 = smul.u32 8, %s24
          %s195 = smul.u32 2, %s25
          %s197 = ssub.s32 1024, 1024
          %198 = vsyncadd %s190, %s197
          %s199 = smul.addr %s194, 8
          %s200 = sadd.s32 %s195, %s199
          %s201 = smul.addr %s200, 64
          %s202 = scalar_lea.hbm %s0, %s201
          %s204 = sshll.u32 1, 14
          %s205 = sxor.u32 4294967295, %s204
          %s207 = sld [smem:[#allocation0]]
          %s208 = sadd.s32 2, %s207
          %s210 = sshll.u32 7, 26
          %s211 = sxor.u32 4294967295, %s210
          %s212 = sand.u32 0, %s211
          %s213 = sshll.u32 %s208, 26
          %s214 = sor.u32 %s212, %s213
          %s215 = sshll.u32 %s193, 4
          %s216 = int_to_ptr.vmem [resolvable:$true] %s215
          %222 = sst [smem:[#allocation10]] 512
          %s223 = scalar_lea.smem [#allocation10], 1
          %224 = sst [smem:[%s223]] 128
          %s225 = scalar_lea.smem [#allocation10], 2
          %226 = sst [smem:[%s225]] 2
          %s227 = scalar_lea.smem [#allocation10], 3
          %228 = sst [smem:[%s227]] 64
          %s229 = scalar_lea.smem [#allocation10], 4
          %230 = sst [smem:[%s229]] 64
          %s231 = scalar_lea.smem [#allocation10], 5
          %232 = sst [smem:[%s231]] 4
          %234 = dma.general %s202, 1024, %s216, %s190, 131072, [#allocation10], %s214, 0
        $region28: #{tpu_custom_call.1} parent=23 // pred_fallthru
          _
        // Predicated region
        $region29: #{tpu_custom_call.1} parent=23 // pred_check
          %p235 = pneg %p77
        $region30: #{tpu_custom_call.1} parent=23 // pred_check_branch
          %237 = sbr.rel (%p235) target = $region32
        $region31: #{tpu_custom_call.1} parent=23 // pred_region
          %p238 = scmp.lt.s32.totalorder %s24, 1
          %s239 = scalar_select %p238, %s24, 1
          %s240 = smul.addr %s239, 8
          %s241 = scalar_lea.vmem %s1, %s240
        $region32: #{tpu_custom_call.1} parent=23 // pred_fallthru
          _
      $region24: #{tpu_custom_call.1} parent=5 // pred_fallthru
        _
      %p242 = scmp.le.s32.totalorder 1, %s17
      %p243 = scmp.lt.s32.totalorder %s17, 9
      %p244 = pnand %p242, %p243
      %p245 = pneg %p244
      // Predicated region
      $region33: #{tpu_custom_call.1} parent=5 // pred_check
        _
      $region34: #{tpu_custom_call.1} parent=5 // pred_check_branch
        %247 = sbr.rel (%p244) target = $region36
      $region35: #{tpu_custom_call.1} parent=5 // pred_region
        %s248 = ssub.s32 %s17, 1
        %s249 = sand.u32 %s44, 1
        %s250 = scalar_lea.sflag [#allocation4], %s249
        %s251 = sand.u32 %s44, 1
        %s252 = smul.addr %s251, 64
        %s253 = scalar_lea.vmem [#allocation3], %s252
        // Predicated region
        $region37: #{tpu_custom_call.1} parent=35 // pred_check
          %p254 = pneg %p57
        $region38: #{tpu_custom_call.1} parent=35 // pred_check_branch
          %256 = sbr.rel (%p254) target = $region40
        $region39: #{tpu_custom_call.1} parent=35 // pred_region
          %257 = dma.done %s250, 1024
        $region40: #{tpu_custom_call.1} parent=35 // pred_fallthru
          _
        // Predicated region
        $region41: #{tpu_custom_call.1} parent=35 // pred_check
          %p258 = pneg %p104
        $region42: #{tpu_custom_call.1} parent=35 // pred_check_branch
          %260 = sbr.rel (%p258) target = $region44
        $region43: #{tpu_custom_call.1} parent=35 // pred_region
          %261 = dma.done [#allocation7], 2048
        $region44: #{tpu_custom_call.1} parent=35 // pred_fallthru
          _
        %s262 = sand.u32 %s44, 1
        %s263 = scalar_lea.sflag [#allocation4], %s262
        %s264 = sand.u32 %s44, 1
        %s265 = smul.addr %s264, 64
        %s266 = scalar_lea.vmem [#allocation3], %s265
        %p267 = pneg %p57
        %p268 = pneg %p54
        %p269 = scmp.lt.s32.totalorder %s26, 1
        %s270 = scalar_select %p269, %s26, 1
        %s271 = smul.addr %s270, 8
        %s272 = scalar_lea.vmem %s1, %s271
        %p273 = pneg %p83
        %p274 = pneg %p80
        %p275 = pneg %p104
        %p276 = pneg %p101
        %p277 = pneg %p125
        %p278 = pneg %p122
        %p279 = pneg %p151
        %p280 = pneg %p148
        %s281 = sand.u32 %s138, 1
        %s282 = scalar_lea.sflag [#allocation5], %s281
        %s283 = sand.u32 %s138, 1
        %s284 = smul.addr %s283, 8
        %s285 = scalar_lea.vmem [#allocation8], %s284
        %s286 = smul.u32 8, %s26
        %s287 = smul.u32 2, %s27
        %p288 = scmp.lt.s32.totalorder %s26, 1
        %s289 = scalar_select %p288, %s26, 1
        %s290 = smul.addr %s289, 8
        %s291 = scalar_lea.vmem %s1, %s290
        %p294 = scmp.eq.s32.totalorder %s27, 0
        // Predicated region
        $region45: #{tpu_custom_call.1} parent=35 // pred_check
          %p295 = pneg %p294
        $region46: #{tpu_custom_call.1} parent=35 // pred_check_branch
          %297 = sbr.rel (%p295) target = $region48
        $region47: #{tpu_custom_call.1} parent=35 // pred_region
          %298 = vst [vmem:[#allocation2] sm:$0xff] 0.0
        $region48: #{tpu_custom_call.1} parent=35 // pred_fallthru
          _
        %v299 = vld [vmem:[%s253] sm:$0xf]
        %v300 = vld [vmem:[%s253 + $0x4] sm:$0xf]
        %v301 = vld [vmem:[%s253 + $0x8] sm:$0xf]
        %v302 = vld [vmem:[%s253 + $0xc] sm:$0xf]
        %v303 = vld [vmem:[%s253 + $0x10] sm:$0xf]
        %v304 = vld [vmem:[%s253 + $0x14] sm:$0xf]
        %v305 = vld [vmem:[%s253 + $0x18] sm:$0xf]
        %v306 = vld [vmem:[%s253 + $0x1c] sm:$0xf]
        %v307 = vld [vmem:[%s253 + $0x20] sm:$0xf]
        %v308 = vld [vmem:[%s253 + $0x24] sm:$0xf]
        %v309 = vld [vmem:[%s253 + $0x28] sm:$0xf]
        %v310 = vld [vmem:[%s253 + $0x2c] sm:$0xf]
        %v311 = vld [vmem:[%s253 + $0x30] sm:$0xf]
        %v312 = vld [vmem:[%s253 + $0x34] sm:$0xf]
        %v313 = vld [vmem:[%s253 + $0x38] sm:$0xf]
        %v314 = vld [vmem:[%s253 + $0x3c] sm:$0xf]
        %v317 = vunpack.c.l.b16 %v299
        %v318 = vunpack.c.l.b16 %v300
        %v319 = vpack.c.b16 %v318, %v317
        %vm321 = vcmask 130048
        %v323 = vsel %vm321, 1065369472, 0
        %325 = vmatprep.subr.bf16.mxu0 0
        %326 = vmatpush1.bf16.msra.mxu0 0
        %327 = vmatprep.subr.bf16.mxu0 0
        %328 = vmatpush1.bf16.msra.mxu0 0
        %329 = vmatprep.subr.bf16.mxu0 0
        %330 = vmatpush1.bf16.msra.mxu0 0
        %331 = vmatprep.subr.bf16.mxu0 0
        %332 = vmatpush1.bf16.msra.mxu0 0
        %333 = vmatprep.subr.bf16.mxu0 0
        %334 = vmatpush1.bf16.msra.mxu0 0
        %335 = vmatprep.subr.bf16.mxu0 0
        %336 = vmatpush1.bf16.msra.mxu0 0
        %337 = vmatprep.subr.bf16.mxu0 0
        %338 = vmatpush1.bf16.msra.mxu0 0
        %339 = vmatprep.subr.bf16.mxu0 0
        %340 = vmatpush1.bf16.msra.mxu0 %v319
        %341 = vmatprep.subr.bf16.mxu0 0
        %342 = vmatpush2.bf16.msra.mxu0 0
        %343 = vmatprep.subr.bf16.mxu0 0
        %344 = vmatpush2.bf16.msra.mxu0 0
        %345 = vmatprep.subr.bf16.mxu0 0
        %346 = vmatpush2.bf16.msra.mxu0 0
        %347 = vmatprep.subr.bf16.mxu0 0
        %348 = vmatpush2.bf16.msra.mxu0 0
        %349 = vmatprep.subr.bf16.mxu0 0
        %350 = vmatpush2.bf16.msra.mxu0 0
        %351 = vmatprep.subr.bf16.mxu0 0
        %352 = vmatpush2.bf16.msra.mxu0 0
        %353 = vmatprep.subr.bf16.mxu0 0
        %354 = vmatpush2.bf16.msra.mxu0 0
        %355 = vmatprep.subr.bf16.mxu0 0
        %356 = vmatpush2.bf16.msra.mxu0 0
        %357 = vmatprep.mubr.bf16.mxu0 0
        %358 = vmatmul.mubr.bf16.gmra.mxu0 %v323
        %v359 = vpop.f32.mrf.mxu0
        %v360 = vadd.f32 0.0, %v359
        %v361 = vpop.f32.mrf.mxu0
        %v362 = vpop.f32.mrf.mxu0
        %v363 = vpop.f32.mrf.mxu0
        %364 = vdwg.mxu0
        %v367 = vunpack.c.l.b16 %v301
        %v368 = vunpack.c.l.b16 %v302
        %v369 = vpack.c.b16 %v368, %v367
        %371 = vmatprep.subr.bf16.mxu0 0
        %372 = vmatpush1.bf16.msra.mxu0 0
        %373 = vmatprep.subr.bf16.mxu0 0
        %374 = vmatpush1.bf16.msra.mxu0 0
        %375 = vmatprep.subr.bf16.mxu0 0
        %376 = vmatpush1.bf16.msra.mxu0 0
        %377 = vmatprep.subr.bf16.mxu0 0
        %378 = vmatpush1.bf16.msra.mxu0 0
        %379 = vmatprep.subr.bf16.mxu0 0
        %380 = vmatpush1.bf16.msra.mxu0 0
        %381 = vmatprep.subr.bf16.mxu0 0
        %382 = vmatpush1.bf16.msra.mxu0 0
        %383 = vmatprep.subr.bf16.mxu0 0
        %384 = vmatpush1.bf16.msra.mxu0 0
        %385 = vmatprep.subr.bf16.mxu0 0
        %386 = vmatpush1.bf16.msra.mxu0 %v369
        %387 = vmatprep.subr.bf16.mxu0 0
        %388 = vmatpush2.bf16.msra.mxu0 0
        %389 = vmatprep.subr.bf16.mxu0 0
        %390 = vmatpush2.bf16.msra.mxu0 0
        %391 = vmatprep.subr.bf16.mxu0 0
        %392 = vmatpush2.bf16.msra.mxu0 0
        %393 = vmatprep.subr.bf16.mxu0 0
        %394 = vmatpush2.bf16.msra.mxu0 0
        %395 = vmatprep.subr.bf16.mxu0 0
        %396 = vmatpush2.bf16.msra.mxu0 0
        %397 = vmatprep.subr.bf16.mxu0 0
        %398 = vmatpush2.bf16.msra.mxu0 0
        %399 = vmatprep.subr.bf16.mxu0 0
        %400 = vmatpush2.bf16.msra.mxu0 0
        %401 = vmatprep.subr.bf16.mxu0 0
        %402 = vmatpush2.bf16.msra.mxu0 0
        %403 = vmatprep.mubr.bf16.mxu0 0
        %404 = vmatmul.mubr.bf16.gmra.mxu0 %v323
        %v405 = vpop.f32.mrf.mxu0
        %v406 = vadd.f32 0.0, %v405
        %v407 = vpop.f32.mrf.mxu0
        %v408 = vpop.f32.mrf.mxu0
        %v409 = vpop.f32.mrf.mxu0
        %410 = vdwg.mxu0
        %v413 = vunpack.c.l.b16 %v303
        %v414 = vunpack.c.l.b16 %v304
        %v415 = vpack.c.b16 %v414, %v413
        %417 = vmatprep.subr.bf16.mxu0 0
        %418 = vmatpush1.bf16.msra.mxu0 0
        %419 = vmatprep.subr.bf16.mxu0 0
        %420 = vmatpush1.bf16.msra.mxu0 0
        %421 = vmatprep.subr.bf16.mxu0 0
        %422 = vmatpush1.bf16.msra.mxu0 0
        %423 = vmatprep.subr.bf16.mxu0 0
        %424 = vmatpush1.bf16.msra.mxu0 0
        %425 = vmatprep.subr.bf16.mxu0 0
        %426 = vmatpush1.bf16.msra.mxu0 0
        %427 = vmatprep.subr.bf16.mxu0 0
        %428 = vmatpush1.bf16.msra.mxu0 0
        %429 = vmatprep.subr.bf16.mxu0 0
        %430 = vmatpush1.bf16.msra.mxu0 0
        %431 = vmatprep.subr.bf16.mxu0 0
        %432 = vmatpush1.bf16.msra.mxu0 %v415
        %433 = vmatprep.subr.bf16.mxu0 0
        %434 = vmatpush2.bf16.msra.mxu0 0
        %435 = vmatprep.subr.bf16.mxu0 0
        %436 = vmatpush2.bf16.msra.mxu0 0
        %437 = vmatprep.subr.bf16.mxu0 0
        %438 = vmatpush2.bf16.msra.mxu0 0
        %439 = vmatprep.subr.bf16.mxu0 0
        %440 = vmatpush2.bf16.msra.mxu0 0
        %441 = vmatprep.subr.bf16.mxu0 0
        %442 = vmatpush2.bf16.msra.mxu0 0
        %443 = vmatprep.subr.bf16.mxu0 0
        %444 = vmatpush2.bf16.msra.mxu0 0
        %445 = vmatprep.subr.bf16.mxu0 0
        %446 = vmatpush2.bf16.msra.mxu0 0
        %447 = vmatprep.subr.bf16.mxu0 0
        %448 = vmatpush2.bf16.msra.mxu0 0
        %449 = vmatprep.mubr.bf16.mxu0 0
        %450 = vmatmul.mubr.bf16.gmra.mxu0 %v323
        %v451 = vpop.f32.mrf.mxu0
        %v452 = vadd.f32 0.0, %v451
        %v453 = vpop.f32.mrf.mxu0
        %v454 = vpop.f32.mrf.mxu0
        %v455 = vpop.f32.mrf.mxu0
        %456 = vdwg.mxu0
        %v459 = vunpack.c.l.b16 %v305
        %v460 = vunpack.c.l.b16 %v306
        %v461 = vpack.c.b16 %v460, %v459
        %463 = vmatprep.subr.bf16.mxu0 0
        %464 = vmatpush1.bf16.msra.mxu0 0
        %465 = vmatprep.subr.bf16.mxu0 0
        %466 = vmatpush1.bf16.msra.mxu0 0
        %467 = vmatprep.subr.bf16.mxu0 0
        %468 = vmatpush1.bf16.msra.mxu0 0
        %469 = vmatprep.subr.bf16.mxu0 0
        %470 = vmatpush1.bf16.msra.mxu0 0
        %471 = vmatprep.subr.bf16.mxu0 0
        %472 = vmatpush1.bf16.msra.mxu0 0
        %473 = vmatprep.subr.bf16.mxu0 0
        %474 = vmatpush1.bf16.msra.mxu0 0
        %475 = vmatprep.subr.bf16.mxu0 0
        %476 = vmatpush1.bf16.msra.mxu0 0
        %477 = vmatprep.subr.bf16.mxu0 0
        %478 = vmatpush1.bf16.msra.mxu0 %v461
        %479 = vmatprep.subr.bf16.mxu0 0
        %480 = vmatpush2.bf16.msra.mxu0 0
        %481 = vmatprep.subr.bf16.mxu0 0
        %482 = vmatpush2.bf16.msra.mxu0 0
        %483 = vmatprep.subr.bf16.mxu0 0
        %484 = vmatpush2.bf16.msra.mxu0 0
        %485 = vmatprep.subr.bf16.mxu0 0
        %486 = vmatpush2.bf16.msra.mxu0 0
        %487 = vmatprep.subr.bf16.mxu0 0
        %488 = vmatpush2.bf16.msra.mxu0 0
        %489 = vmatprep.subr.bf16.mxu0 0
        %490 = vmatpush2.bf16.msra.mxu0 0
        %491 = vmatprep.subr.bf16.mxu0 0
        %492 = vmatpush2.bf16.msra.mxu0 0
        %493 = vmatprep.subr.bf16.mxu0 0
        %494 = vmatpush2.bf16.msra.mxu0 0
        %495 = vmatprep.mubr.bf16.mxu0 0
        %496 = vmatmul.mubr.bf16.gmra.mxu0 %v323
        %v497 = vpop.f32.mrf.mxu0
        %v498 = vadd.f32 0.0, %v497
        %v499 = vpop.f32.mrf.mxu0
        %v500 = vpop.f32.mrf.mxu0
        %v501 = vpop.f32.mrf.mxu0
        %502 = vdwg.mxu0
        %v505 = vunpack.c.l.b16 %v307
        %v506 = vunpack.c.l.b16 %v308
        %v507 = vpack.c.b16 %v506, %v505
        %509 = vmatprep.subr.bf16.mxu0 0
        %510 = vmatpush1.bf16.msra.mxu0 0
        %511 = vmatprep.subr.bf16.mxu0 0
        %512 = vmatpush1.bf16.msra.mxu0 0
        %513 = vmatprep.subr.bf16.mxu0 0
        %514 = vmatpush1.bf16.msra.mxu0 0
        %515 = vmatprep.subr.bf16.mxu0 0
        %516 = vmatpush1.bf16.msra.mxu0 0
        %517 = vmatprep.subr.bf16.mxu0 0
        %518 = vmatpush1.bf16.msra.mxu0 0
        %519 = vmatprep.subr.bf16.mxu0 0
        %520 = vmatpush1.bf16.msra.mxu0 0
        %521 = vmatprep.subr.bf16.mxu0 0
        %522 = vmatpush1.bf16.msra.mxu0 0
        %523 = vmatprep.subr.bf16.mxu0 0
        %524 = vmatpush1.bf16.msra.mxu0 %v507
        %525 = vmatprep.subr.bf16.mxu0 0
        %526 = vmatpush2.bf16.msra.mxu0 0
        %527 = vmatprep.subr.bf16.mxu0 0
        %528 = vmatpush2.bf16.msra.mxu0 0
        %529 = vmatprep.subr.bf16.mxu0 0
        %530 = vmatpush2.bf16.msra.mxu0 0
        %531 = vmatprep.subr.bf16.mxu0 0
        %532 = vmatpush2.bf16.msra.mxu0 0
        %533 = vmatprep.subr.bf16.mxu0 0
        %534 = vmatpush2.bf16.msra.mxu0 0
        %535 = vmatprep.subr.bf16.mxu0 0
        %536 = vmatpush2.bf16.msra.mxu0 0
        %537 = vmatprep.subr.bf16.mxu0 0
        %538 = vmatpush2.bf16.msra.mxu0 0
        %539 = vmatprep.subr.bf16.mxu0 0
        %540 = vmatpush2.bf16.msra.mxu0 0
        %541 = vmatprep.mubr.bf16.mxu0 0
        %542 = vmatmul.mubr.bf16.gmra.mxu0 %v323
        %v543 = vpop.f32.mrf.mxu0
        %v544 = vadd.f32 0.0, %v543
        %v545 = vpop.f32.mrf.mxu0
        %v546 = vpop.f32.mrf.mxu0
        %v547 = vpop.f32.mrf.mxu0
        %548 = vdwg.mxu0
        %v551 = vunpack.c.l.b16 %v309
        %v552 = vunpack.c.l.b16 %v310
        %v553 = vpack.c.b16 %v552, %v551
        %555 = vmatprep.subr.bf16.mxu0 0
        %556 = vmatpush1.bf16.msra.mxu0 0
        %557 = vmatprep.subr.bf16.mxu0 0
        %558 = vmatpush1.bf16.msra.mxu0 0
        %559 = vmatprep.subr.bf16.mxu0 0
        %560 = vmatpush1.bf16.msra.mxu0 0
        %561 = vmatprep.subr.bf16.mxu0 0
        %562 = vmatpush1.bf16.msra.mxu0 0
        %563 = vmatprep.subr.bf16.mxu0 0
        %564 = vmatpush1.bf16.msra.mxu0 0
        %565 = vmatprep.subr.bf16.mxu0 0
        %566 = vmatpush1.bf16.msra.mxu0 0
        %567 = vmatprep.subr.bf16.mxu0 0
        %568 = vmatpush1.bf16.msra.mxu0 0
        %569 = vmatprep.subr.bf16.mxu0 0
        %570 = vmatpush1.bf16.msra.mxu0 %v553
        %571 = vmatprep.subr.bf16.mxu0 0
        %572 = vmatpush2.bf16.msra.mxu0 0
        %573 = vmatprep.subr.bf16.mxu0 0
        %574 = vmatpush2.bf16.msra.mxu0 0
        %575 = vmatprep.subr.bf16.mxu0 0
        %576 = vmatpush2.bf16.msra.mxu0 0
        %577 = vmatprep.subr.bf16.mxu0 0
        %578 = vmatpush2.bf16.msra.mxu0 0
        %579 = vmatprep.subr.bf16.mxu0 0
        %580 = vmatpush2.bf16.msra.mxu0 0
        %581 = vmatprep.subr.bf16.mxu0 0
        %582 = vmatpush2.bf16.msra.mxu0 0
        %583 = vmatprep.subr.bf16.mxu0 0
        %584 = vmatpush2.bf16.msra.mxu0 0
        %585 = vmatprep.subr.bf16.mxu0 0
        %586 = vmatpush2.bf16.msra.mxu0 0
        %587 = vmatprep.mubr.bf16.mxu0 0
        %588 = vmatmul.mubr.bf16.gmra.mxu0 %v323
        %v589 = vpop.f32.mrf.mxu0
        %v590 = vadd.f32 0.0, %v589
        %v591 = vpop.f32.mrf.mxu0
        %v592 = vpop.f32.mrf.mxu0
        %v593 = vpop.f32.mrf.mxu0
        %594 = vdwg.mxu0
        %v597 = vunpack.c.l.b16 %v311
        %v598 = vunpack.c.l.b16 %v312
        %v599 = vpack.c.b16 %v598, %v597
        %601 = vmatprep.subr.bf16.mxu0 0
        %602 = vmatpush1.bf16.msra.mxu0 0
        %603 = vmatprep.subr.bf16.mxu0 0
        %604 = vmatpush1.bf16.msra.mxu0 0
        %605 = vmatprep.subr.bf16.mxu0 0
        %606 = vmatpush1.bf16.msra.mxu0 0
        %607 = vmatprep.subr.bf16.mxu0 0
        %608 = vmatpush1.bf16.msra.mxu0 0
        %609 = vmatprep.subr.bf16.mxu0 0
        %610 = vmatpush1.bf16.msra.mxu0 0
        %611 = vmatprep.subr.bf16.mxu0 0
        %612 = vmatpush1.bf16.msra.mxu0 0
        %613 = vmatprep.subr.bf16.mxu0 0
        %614 = vmatpush1.bf16.msra.mxu0 0
        %615 = vmatprep.subr.bf16.mxu0 0
        %616 = vmatpush1.bf16.msra.mxu0 %v599
        %617 = vmatprep.subr.bf16.mxu0 0
        %618 = vmatpush2.bf16.msra.mxu0 0
        %619 = vmatprep.subr.bf16.mxu0 0
        %620 = vmatpush2.bf16.msra.mxu0 0
        %621 = vmatprep.subr.bf16.mxu0 0
        %622 = vmatpush2.bf16.msra.mxu0 0
        %623 = vmatprep.subr.bf16.mxu0 0
        %624 = vmatpush2.bf16.msra.mxu0 0
        %625 = vmatprep.subr.bf16.mxu0 0
        %626 = vmatpush2.bf16.msra.mxu0 0
        %627 = vmatprep.subr.bf16.mxu0 0
        %628 = vmatpush2.bf16.msra.mxu0 0
        %629 = vmatprep.subr.bf16.mxu0 0
        %630 = vmatpush2.bf16.msra.mxu0 0
        %631 = vmatprep.subr.bf16.mxu0 0
        %632 = vmatpush2.bf16.msra.mxu0 0
        %633 = vmatprep.mubr.bf16.mxu0 0
        %634 = vmatmul.mubr.bf16.gmra.mxu0 %v323
        %v635 = vpop.f32.mrf.mxu0
        %v636 = vadd.f32 0.0, %v635
        %v637 = vpop.f32.mrf.mxu0
        %v638 = vpop.f32.mrf.mxu0
        %v639 = vpop.f32.mrf.mxu0
        %640 = vdwg.mxu0
        %v643 = vunpack.c.l.b16 %v313
        %v644 = vunpack.c.l.b16 %v314
        %v645 = vpack.c.b16 %v644, %v643
        %647 = vmatprep.subr.bf16.mxu0 0
        %648 = vmatpush1.bf16.msra.mxu0 0
        %649 = vmatprep.subr.bf16.mxu0 0
        %650 = vmatpush1.bf16.msra.mxu0 0
        %651 = vmatprep.subr.bf16.mxu0 0
        %652 = vmatpush1.bf16.msra.mxu0 0
        %653 = vmatprep.subr.bf16.mxu0 0
        %654 = vmatpush1.bf16.msra.mxu0 0
        %655 = vmatprep.subr.bf16.mxu0 0
        %656 = vmatpush1.bf16.msra.mxu0 0
        %657 = vmatprep.subr.bf16.mxu0 0
        %658 = vmatpush1.bf16.msra.mxu0 0
        %659 = vmatprep.subr.bf16.mxu0 0
        %660 = vmatpush1.bf16.msra.mxu0 0
        %661 = vmatprep.subr.bf16.mxu0 0
        %662 = vmatpush1.bf16.msra.mxu0 %v645
        %663 = vmatprep.subr.bf16.mxu0 0
        %664 = vmatpush2.bf16.msra.mxu0 0
        %665 = vmatprep.subr.bf16.mxu0 0
        %666 = vmatpush2.bf16.msra.mxu0 0
        %667 = vmatprep.subr.bf16.mxu0 0
        %668 = vmatpush2.bf16.msra.mxu0 0
        %669 = vmatprep.subr.bf16.mxu0 0
        %670 = vmatpush2.bf16.msra.mxu0 0
        %671 = vmatprep.subr.bf16.mxu0 0
        %672 = vmatpush2.bf16.msra.mxu0 0
        %673 = vmatprep.subr.bf16.mxu0 0
        %674 = vmatpush2.bf16.msra.mxu0 0
        %675 = vmatprep.subr.bf16.mxu0 0
        %676 = vmatpush2.bf16.msra.mxu0 0
        %677 = vmatprep.subr.bf16.mxu0 0
        %678 = vmatpush2.bf16.msra.mxu0 0
        %679 = vmatprep.mubr.bf16.mxu0 0
        %680 = vmatmul.mubr.bf16.gmra.mxu0 %v323
        %v681 = vpop.f32.mrf.mxu0
        %v682 = vadd.f32 0.0, %v681
        %v683 = vpop.f32.mrf.mxu0
        %v684 = vpop.f32.mrf.mxu0
        %v685 = vpop.f32.mrf.mxu0
        %686 = vdwg.mxu0
        %v687 = vld [vmem:[#allocation2] sm:$0xff]
        %v696 = vrot.slane %v406, 7
        %vm697 = vcmask 1041409
        %v698 = vsel %vm697, %v696, %v360
        %v699 = vrot.slane %v452, 6
        %vm700 = vcmask 1042434
        %v701 = vsel %vm700, %v699, %v698
        %v702 = vrot.slane %v498, 5
        %vm703 = vcmask 1043459
        %v704 = vsel %vm703, %v702, %v701
        %v705 = vrot.slane %v544, 4
        %vm706 = vcmask 1044484
        %v707 = vsel %vm706, %v705, %v704
        %v708 = vrot.slane %v590, 3
        %vm709 = vcmask 1045509
        %v710 = vsel %vm709, %v708, %v707
        %v711 = vrot.slane %v636, 2
        %vm712 = vcmask 1046534
        %v713 = vsel %vm712, %v711, %v710
        %v714 = vrot.slane %v682, 1
        %vm715 = vcmask 1047559
        %v716 = vsel %vm715, %v714, %v713
        %v718 = vadd.f32 %v687, %v716
        %719 = vst [vmem:[#allocation2] sm:$0xff] %v718
        %p720 = scmp.eq.s32.totalorder %s27, 3
        // Predicated region
        $region49: #{tpu_custom_call.1} parent=35 // pred_check
          %p721 = pneg %p720
        $region50: #{tpu_custom_call.1} parent=35 // pred_check_branch
          %723 = sbr.rel (%p721) target = $region52
        $region51: #{tpu_custom_call.1} parent=35 // pred_region
          %v724 = vld [vmem:[%s291] sm:$0xff]
          %v725 = vmax.f32 %v724, 1.0
          %v726 = vrcp.pop %v725
          %vm727 = vcmp.gt.f32.partialorder %v724, 0.0
          %v728 = vld [vmem:[#allocation2] sm:$0xff]
          %730 = vset.pattern.permute.xlu0 0
          %731 = vperm.xlu0 %730, %v726
          %v732 = vpop.permute.xlu0 %731
          %v734 = vmul.f32 %v728, %v732
          %v735 = vsel %vm727, 1, 0
          %736 = vset.pattern.permute.xlu0 0
          %737 = vperm.xlu0 %736, %v735
          %v738 = vpop.permute.xlu0 %737
          %vm739 = vcmp.eq.s32.totalorder %v738, 1
          %v740 = vsel %vm739, %v734, 0.0
          %v741 = vld [vmem:[#allocation6] sm:$0xff]
          %v742 = vld [vmem:[#allocation6 + $0x8] sm:$0xff]
          %v743 = vld [vmem:[#allocation6 + $0x10] sm:$0xff]
          %v744 = vld [vmem:[#allocation6 + $0x18] sm:$0xff]
          %v745 = vld [vmem:[#allocation6 + $0x20] sm:$0xff]
          %v746 = vld [vmem:[#allocation6 + $0x28] sm:$0xff]
          %v747 = vld [vmem:[#allocation6 + $0x30] sm:$0xff]
          %v748 = vld [vmem:[#allocation6 + $0x38] sm:$0xff]
          %v749 = vld [vmem:[#allocation6 + $0x40] sm:$0xff]
          %v750 = vld [vmem:[#allocation6 + $0x48] sm:$0xff]
          %v751 = vld [vmem:[#allocation6 + $0x50] sm:$0xff]
          %v752 = vld [vmem:[#allocation6 + $0x58] sm:$0xff]
          %v753 = vld [vmem:[#allocation6 + $0x60] sm:$0xff]
          %v754 = vld [vmem:[#allocation6 + $0x68] sm:$0xff]
          %v755 = vld [vmem:[#allocation6 + $0x70] sm:$0xff]
          %v756 = vld [vmem:[#allocation6 + $0x78] sm:$0xff]
          %v757 = vld [vmem:[%s3] sm:$0x1]
          %v759 = vlaneseq
          %v760 = vshrl.u32 %v759, 7
          %v761 = vsub.s32 0, %v760
          %v762 = vrot.slane %v757, %v761
          %764 = vmatprep.subr.mxu0 0.0
          %v765 = vand.u32 %v756, 4294901760
          %766 = vmatpush1.msra.mxu0 %v765
          %767 = vmatprep.subr.mxu0 0.0
          %v768 = vand.u32 %v755, 4294901760
          %769 = vmatpush1.msra.mxu0 %v768
          %770 = vmatprep.subr.mxu0 0.0
          %v771 = vand.u32 %v754, 4294901760
          %772 = vmatpush1.msra.mxu0 %v771
          %773 = vmatprep.subr.mxu0 0.0
          %v774 = vand.u32 %v753, 4294901760
          %775 = vmatpush1.msra.mxu0 %v774
          %776 = vmatprep.subr.mxu0 0.0
          %v777 = vand.u32 %v752, 4294901760
          %778 = vmatpush1.msra.mxu0 %v777
          %779 = vmatprep.subr.mxu0 0.0
          %v780 = vand.u32 %v751, 4294901760
          %781 = vmatpush1.msra.mxu0 %v780
          %782 = vmatprep.subr.mxu0 0.0
          %v783 = vand.u32 %v750, 4294901760
          %784 = vmatpush1.msra.mxu0 %v783
          %785 = vmatprep.subr.mxu0 0.0
          %v786 = vand.u32 %v749, 4294901760
          %787 = vmatpush1.msra.mxu0 %v786
          %788 = vmatprep.subr.mxu0 0.0
          %v789 = vand.u32 %v748, 4294901760
          %790 = vmatpush1.msra.mxu0 %v789
          %791 = vmatprep.subr.mxu0 0.0
          %v792 = vand.u32 %v747, 4294901760
          %793 = vmatpush1.msra.mxu0 %v792
          %794 = vmatprep.subr.mxu0 0.0
          %v795 = vand.u32 %v746, 4294901760
          %796 = vmatpush1.msra.mxu0 %v795
          %797 = vmatprep.subr.mxu0 0.0
          %v798 = vand.u32 %v745, 4294901760
          %799 = vmatpush1.msra.mxu0 %v798
          %800 = vmatprep.subr.mxu0 0.0
          %v801 = vand.u32 %v744, 4294901760
          %802 = vmatpush1.msra.mxu0 %v801
          %803 = vmatprep.subr.mxu0 0.0
          %v804 = vand.u32 %v743, 4294901760
          %805 = vmatpush1.msra.mxu0 %v804
          %806 = vmatprep.subr.mxu0 0.0
          %v807 = vand.u32 %v742, 4294901760
          %808 = vmatpush1.msra.mxu0 %v807
          %809 = vmatprep.subr.mxu0 0.0
          %v810 = vand.u32 %v741, 4294901760
          %811 = vmatpush1.msra.mxu0 %v810
          %812 = vmatprep.subr.mxu0 0.0
          %813 = vmatpush2.msra.mxu0 0.0
          %814 = vmatprep.subr.mxu0 0.0
          %815 = vmatpush2.msra.mxu0 0.0
          %816 = vmatprep.subr.mxu0 0.0
          %817 = vmatpush2.msra.mxu0 0.0
          %818 = vmatprep.subr.mxu0 0.0
          %819 = vmatpush2.msra.mxu0 0.0
          %820 = vmatprep.subr.mxu0 0.0
          %821 = vmatpush2.msra.mxu0 0.0
          %822 = vmatprep.subr.mxu0 0.0
          %823 = vmatpush2.msra.mxu0 0.0
          %824 = vmatprep.subr.mxu0 0.0
          %825 = vmatpush2.msra.mxu0 0.0
          %826 = vmatprep.subr.mxu0 0.0
          %827 = vmatpush2.msra.mxu0 0.0
          %828 = vmatprep.subr.mxu0 0.0
          %829 = vmatpush2.msra.mxu0 0.0
          %830 = vmatprep.subr.mxu0 0.0
          %831 = vmatpush2.msra.mxu0 0.0
          %832 = vmatprep.subr.mxu0 0.0
          %833 = vmatpush2.msra.mxu0 0.0
          %834 = vmatprep.subr.mxu0 0.0
          %835 = vmatpush2.msra.mxu0 0.0
          %836 = vmatprep.subr.mxu0 0.0
          %837 = vmatpush2.msra.mxu0 0.0
          %838 = vmatprep.subr.mxu0 0.0
          %839 = vmatpush2.msra.mxu0 0.0
          %840 = vmatprep.subr.mxu0 0.0
          %841 = vmatpush2.msra.mxu0 0.0
          %842 = vmatprep.subr.mxu0 0.0
          %843 = vmatpush2.msra.mxu0 0.0
          %844 = vmatprep.mubr.f32.mxu0 0.0
          %v845 = vand.u32 %v740, 4294901760
          %v846 = vsub.f32 %v740, %v845
          %v847 = vand.u32 %v846, 4294901760
          %v848 = vsub.f32 %v846, %v847
          %v849 = vand.u32 %v848, 4294901760
          %850 = vmatmul.mubr.f32.gmra.mxu0 %v849
          %v851 = vpop.f32.mrf.mxu0
          %v852 = vadd.f32 %v762, %v851
          %v853 = vpop.f32.mrf.mxu0
          %854 = vdwg.mxu0
          %855 = vmatprep.subr.mxu0 0.0
          %v856 = vand.u32 %v756, 4294901760
          %v857 = vsub.f32 %v756, %v856
          %v858 = vand.u32 %v857, 4294901760
          %v859 = vsub.f32 %v857, %v858
          %v860 = vand.u32 %v859, 4294901760
          %861 = vmatpush1.msra.mxu0 %v860
          %862 = vmatprep.subr.mxu0 0.0
          %v863 = vand.u32 %v755, 4294901760
          %v864 = vsub.f32 %v755, %v863
          %v865 = vand.u32 %v864, 4294901760
          %v866 = vsub.f32 %v864, %v865
          %v867 = vand.u32 %v866, 4294901760
          %868 = vmatpush1.msra.mxu0 %v867
          %869 = vmatprep.subr.mxu0 0.0
          %v870 = vand.u32 %v754, 4294901760
          %v871 = vsub.f32 %v754, %v870
          %v872 = vand.u32 %v871, 4294901760
          %v873 = vsub.f32 %v871, %v872
          %v874 = vand.u32 %v873, 4294901760
          %875 = vmatpush1.msra.mxu0 %v874
          %876 = vmatprep.subr.mxu0 0.0
          %v877 = vand.u32 %v753, 4294901760
          %v878 = vsub.f32 %v753, %v877
          %v879 = vand.u32 %v878, 4294901760
          %v880 = vsub.f32 %v878, %v879
          %v881 = vand.u32 %v880, 4294901760
          %882 = vmatpush1.msra.mxu0 %v881
          %883 = vmatprep.subr.mxu0 0.0
          %v884 = vand.u32 %v752, 4294901760
          %v885 = vsub.f32 %v752, %v884
          %v886 = vand.u32 %v885, 4294901760
          %v887 = vsub.f32 %v885, %v886
          %v888 = vand.u32 %v887, 4294901760
          %889 = vmatpush1.msra.mxu0 %v888
          %890 = vmatprep.subr.mxu0 0.0
          %v891 = vand.u32 %v751, 4294901760
          %v892 = vsub.f32 %v751, %v891
          %v893 = vand.u32 %v892, 4294901760
          %v894 = vsub.f32 %v892, %v893
          %v895 = vand.u32 %v894, 4294901760
          %896 = vmatpush1.msra.mxu0 %v895
          %897 = vmatprep.subr.mxu0 0.0
          %v898 = vand.u32 %v750, 4294901760
          %v899 = vsub.f32 %v750, %v898
          %v900 = vand.u32 %v899, 4294901760
          %v901 = vsub.f32 %v899, %v900
          %v902 = vand.u32 %v901, 4294901760
          %903 = vmatpush1.msra.mxu0 %v902
          %904 = vmatprep.subr.mxu0 0.0
          %v905 = vand.u32 %v749, 4294901760
          %v906 = vsub.f32 %v749, %v905
          %v907 = vand.u32 %v906, 4294901760
          %v908 = vsub.f32 %v906, %v907
          %v909 = vand.u32 %v908, 4294901760
          %910 = vmatpush1.msra.mxu0 %v909
          %911 = vmatprep.subr.mxu0 0.0
          %v912 = vand.u32 %v748, 4294901760
          %v913 = vsub.f32 %v748, %v912
          %v914 = vand.u32 %v913, 4294901760
          %v915 = vsub.f32 %v913, %v914
          %v916 = vand.u32 %v915, 4294901760
          %917 = vmatpush1.msra.mxu0 %v916
          %918 = vmatprep.subr.mxu0 0.0
          %v919 = vand.u32 %v747, 4294901760
          %v920 = vsub.f32 %v747, %v919
          %v921 = vand.u32 %v920, 4294901760
          %v922 = vsub.f32 %v920, %v921
          %v923 = vand.u32 %v922, 4294901760
          %924 = vmatpush1.msra.mxu0 %v923
          %925 = vmatprep.subr.mxu0 0.0
          %v926 = vand.u32 %v746, 4294901760
          %v927 = vsub.f32 %v746, %v926
          %v928 = vand.u32 %v927, 4294901760
          %v929 = vsub.f32 %v927, %v928
          %v930 = vand.u32 %v929, 4294901760
          %931 = vmatpush1.msra.mxu0 %v930
          %932 = vmatprep.subr.mxu0 0.0
          %v933 = vand.u32 %v745, 4294901760
          %v934 = vsub.f32 %v745, %v933
          %v935 = vand.u32 %v934, 4294901760
          %v936 = vsub.f32 %v934, %v935
          %v937 = vand.u32 %v936, 4294901760
          %938 = vmatpush1.msra.mxu0 %v937
          %939 = vmatprep.subr.mxu0 0.0
          %v940 = vand.u32 %v744, 4294901760
          %v941 = vsub.f32 %v744, %v940
          %v942 = vand.u32 %v941, 4294901760
          %v943 = vsub.f32 %v941, %v942
          %v944 = vand.u32 %v943, 4294901760
          %945 = vmatpush1.msra.mxu0 %v944
          %946 = vmatprep.subr.mxu0 0.0
          %v947 = vand.u32 %v743, 4294901760
          %v948 = vsub.f32 %v743, %v947
          %v949 = vand.u32 %v948, 4294901760
          %v950 = vsub.f32 %v948, %v949
          %v951 = vand.u32 %v950, 4294901760
          %952 = vmatpush1.msra.mxu0 %v951
          %953 = vmatprep.subr.mxu0 0.0
          %v954 = vand.u32 %v742, 4294901760
          %v955 = vsub.f32 %v742, %v954
          %v956 = vand.u32 %v955, 4294901760
          %v957 = vsub.f32 %v955, %v956
          %v958 = vand.u32 %v957, 4294901760
          %959 = vmatpush1.msra.mxu0 %v958
          %960 = vmatprep.subr.mxu0 0.0
          %v961 = vand.u32 %v741, 4294901760
          %v962 = vsub.f32 %v741, %v961
          %v963 = vand.u32 %v962, 4294901760
          %v964 = vsub.f32 %v962, %v963
          %v965 = vand.u32 %v964, 4294901760
          %966 = vmatpush1.msra.mxu0 %v965
          %967 = vmatprep.subr.mxu0 0.0
          %968 = vmatpush2.msra.mxu0 0.0
          %969 = vmatprep.subr.mxu0 0.0
          %970 = vmatpush2.msra.mxu0 0.0
          %971 = vmatprep.subr.mxu0 0.0
          %972 = vmatpush2.msra.mxu0 0.0
          %973 = vmatprep.subr.mxu0 0.0
          %974 = vmatpush2.msra.mxu0 0.0
          %975 = vmatprep.subr.mxu0 0.0
          %976 = vmatpush2.msra.mxu0 0.0
          %977 = vmatprep.subr.mxu0 0.0
          %978 = vmatpush2.msra.mxu0 0.0
          %979 = vmatprep.subr.mxu0 0.0
          %980 = vmatpush2.msra.mxu0 0.0
          %981 = vmatprep.subr.mxu0 0.0
          %982 = vmatpush2.msra.mxu0 0.0
          %983 = vmatprep.subr.mxu0 0.0
          %984 = vmatpush2.msra.mxu0 0.0
          %985 = vmatprep.subr.mxu0 0.0
          %986 = vmatpush2.msra.mxu0 0.0
          %987 = vmatprep.subr.mxu0 0.0
          %988 = vmatpush2.msra.mxu0 0.0
          %989 = vmatprep.subr.mxu0 0.0
          %990 = vmatpush2.msra.mxu0 0.0
          %991 = vmatprep.subr.mxu0 0.0
          %992 = vmatpush2.msra.mxu0 0.0
          %993 = vmatprep.subr.mxu0 0.0
          %994 = vmatpush2.msra.mxu0 0.0
          %995 = vmatprep.subr.mxu0 0.0
          %996 = vmatpush2.msra.mxu0 0.0
          %997 = vmatprep.subr.mxu0 0.0
          %998 = vmatpush2.msra.mxu0 0.0
          %999 = vmatprep.mubr.f32.mxu0 0.0
          %v1000 = vand.u32 %v740, 4294901760
          %1001 = vmatmul.mubr.f32.gmra.mxu0 %v1000
          %v1002 = vpop.f32.mrf.mxu0
          %v1003 = vadd.f32 %v852, %v1002
          %v1004 = vpop.f32.mrf.mxu0
          %1005 = vdwg.mxu0
          %1006 = vmatprep.subr.mxu0 0.0
          %v1007 = vand.u32 %v756, 4294901760
          %v1008 = vsub.f32 %v756, %v1007
          %1009 = vmatpush1.msra.mxu0 %v1008
          %1010 = vmatprep.subr.mxu0 0.0
          %v1011 = vand.u32 %v755, 4294901760
          %v1012 = vsub.f32 %v755, %v1011
          %1013 = vmatpush1.msra.mxu0 %v1012
          %1014 = vmatprep.subr.mxu0 0.0
          %v1015 = vand.u32 %v754, 4294901760
          %v1016 = vsub.f32 %v754, %v1015
          %1017 = vmatpush1.msra.mxu0 %v1016
          %1018 = vmatprep.subr.mxu0 0.0
          %v1019 = vand.u32 %v753, 4294901760
          %v1020 = vsub.f32 %v753, %v1019
          %1021 = vmatpush1.msra.mxu0 %v1020
          %1022 = vmatprep.subr.mxu0 0.0
          %v1023 = vand.u32 %v752, 4294901760
          %v1024 = vsub.f32 %v752, %v1023
          %1025 = vmatpush1.msra.mxu0 %v1024
          %1026 = vmatprep.subr.mxu0 0.0
          %v1027 = vand.u32 %v751, 4294901760
          %v1028 = vsub.f32 %v751, %v1027
          %1029 = vmatpush1.msra.mxu0 %v1028
          %1030 = vmatprep.subr.mxu0 0.0
          %v1031 = vand.u32 %v750, 4294901760
          %v1032 = vsub.f32 %v750, %v1031
          %1033 = vmatpush1.msra.mxu0 %v1032
          %1034 = vmatprep.subr.mxu0 0.0
          %v1035 = vand.u32 %v749, 4294901760
          %v1036 = vsub.f32 %v749, %v1035
          %1037 = vmatpush1.msra.mxu0 %v1036
          %1038 = vmatprep.subr.mxu0 0.0
          %v1039 = vand.u32 %v748, 4294901760
          %v1040 = vsub.f32 %v748, %v1039
          %1041 = vmatpush1.msra.mxu0 %v1040
          %1042 = vmatprep.subr.mxu0 0.0
          %v1043 = vand.u32 %v747, 4294901760
          %v1044 = vsub.f32 %v747, %v1043
          %1045 = vmatpush1.msra.mxu0 %v1044
          %1046 = vmatprep.subr.mxu0 0.0
          %v1047 = vand.u32 %v746, 4294901760
          %v1048 = vsub.f32 %v746, %v1047
          %1049 = vmatpush1.msra.mxu0 %v1048
          %1050 = vmatprep.subr.mxu0 0.0
          %v1051 = vand.u32 %v745, 4294901760
          %v1052 = vsub.f32 %v745, %v1051
          %1053 = vmatpush1.msra.mxu0 %v1052
          %1054 = vmatprep.subr.mxu0 0.0
          %v1055 = vand.u32 %v744, 4294901760
          %v1056 = vsub.f32 %v744, %v1055
          %1057 = vmatpush1.msra.mxu0 %v1056
          %1058 = vmatprep.subr.mxu0 0.0
          %v1059 = vand.u32 %v743, 4294901760
          %v1060 = vsub.f32 %v743, %v1059
          %1061 = vmatpush1.msra.mxu0 %v1060
          %1062 = vmatprep.subr.mxu0 0.0
          %v1063 = vand.u32 %v742, 4294901760
          %v1064 = vsub.f32 %v742, %v1063
          %1065 = vmatpush1.msra.mxu0 %v1064
          %1066 = vmatprep.subr.mxu0 0.0
          %v1067 = vand.u32 %v741, 4294901760
          %v1068 = vsub.f32 %v741, %v1067
          %1069 = vmatpush1.msra.mxu0 %v1068
          %1070 = vmatprep.subr.mxu0 0.0
          %1071 = vmatpush2.msra.mxu0 0.0
          %1072 = vmatprep.subr.mxu0 0.0
          %1073 = vmatpush2.msra.mxu0 0.0
          %1074 = vmatprep.subr.mxu0 0.0
          %1075 = vmatpush2.msra.mxu0 0.0
          %1076 = vmatprep.subr.mxu0 0.0
          %1077 = vmatpush2.msra.mxu0 0.0
          %1078 = vmatprep.subr.mxu0 0.0
          %1079 = vmatpush2.msra.mxu0 0.0
          %1080 = vmatprep.subr.mxu0 0.0
          %1081 = vmatpush2.msra.mxu0 0.0
          %1082 = vmatprep.subr.mxu0 0.0
          %1083 = vmatpush2.msra.mxu0 0.0
          %1084 = vmatprep.subr.mxu0 0.0
          %1085 = vmatpush2.msra.mxu0 0.0
          %1086 = vmatprep.subr.mxu0 0.0
          %1087 = vmatpush2.msra.mxu0 0.0
          %1088 = vmatprep.subr.mxu0 0.0
          %1089 = vmatpush2.msra.mxu0 0.0
          %1090 = vmatprep.subr.mxu0 0.0
          %1091 = vmatpush2.msra.mxu0 0.0
          %1092 = vmatprep.subr.mxu0 0.0
          %1093 = vmatpush2.msra.mxu0 0.0
          %1094 = vmatprep.subr.mxu0 0.0
          %1095 = vmatpush2.msra.mxu0 0.0
          %1096 = vmatprep.subr.mxu0 0.0
          %1097 = vmatpush2.msra.mxu0 0.0
          %1098 = vmatprep.subr.mxu0 0.0
          %1099 = vmatpush2.msra.mxu0 0.0
          %1100 = vmatprep.subr.mxu0 0.0
          %1101 = vmatpush2.msra.mxu0 0.0
          %1102 = vmatprep.mubr.f32.mxu0 0.0
          %v1103 = vand.u32 %v740, 4294901760
          %v1104 = vsub.f32 %v740, %v1103
          %1105 = vmatmul.mubr.f32.gmra.mxu0 %v1104
          %v1106 = vpop.f32.mrf.mxu0
          %v1107 = vadd.f32 %v1003, %v1106
          %v1108 = vpop.f32.mrf.mxu0
          %1109 = vdwg.mxu0
          %1110 = vmatprep.subr.mxu0 0.0
          %v1111 = vand.u32 %v756, 4294901760
          %1112 = vmatpush1.msra.mxu0 %v1111
          %1113 = vmatprep.subr.mxu0 0.0
          %v1114 = vand.u32 %v755, 4294901760
          %1115 = vmatpush1.msra.mxu0 %v1114
          %1116 = vmatprep.subr.mxu0 0.0
          %v1117 = vand.u32 %v754, 4294901760
          %1118 = vmatpush1.msra.mxu0 %v1117
          %1119 = vmatprep.subr.mxu0 0.0
          %v1120 = vand.u32 %v753, 4294901760
          %1121 = vmatpush1.msra.mxu0 %v1120
          %1122 = vmatprep.subr.mxu0 0.0
          %v1123 = vand.u32 %v752, 4294901760
          %1124 = vmatpush1.msra.mxu0 %v1123
          %1125 = vmatprep.subr.mxu0 0.0
          %v1126 = vand.u32 %v751, 4294901760
          %1127 = vmatpush1.msra.mxu0 %v1126
          %1128 = vmatprep.subr.mxu0 0.0
          %v1129 = vand.u32 %v750, 4294901760
          %1130 = vmatpush1.msra.mxu0 %v1129
          %1131 = vmatprep.subr.mxu0 0.0
          %v1132 = vand.u32 %v749, 4294901760
          %1133 = vmatpush1.msra.mxu0 %v1132
          %1134 = vmatprep.subr.mxu0 0.0
          %v1135 = vand.u32 %v748, 4294901760
          %1136 = vmatpush1.msra.mxu0 %v1135
          %1137 = vmatprep.subr.mxu0 0.0
          %v1138 = vand.u32 %v747, 4294901760
          %1139 = vmatpush1.msra.mxu0 %v1138
          %1140 = vmatprep.subr.mxu0 0.0
          %v1141 = vand.u32 %v746, 4294901760
          %1142 = vmatpush1.msra.mxu0 %v1141
          %1143 = vmatprep.subr.mxu0 0.0
          %v1144 = vand.u32 %v745, 4294901760
          %1145 = vmatpush1.msra.mxu0 %v1144
          %1146 = vmatprep.subr.mxu0 0.0
          %v1147 = vand.u32 %v744, 4294901760
          %1148 = vmatpush1.msra.mxu0 %v1147
          %1149 = vmatprep.subr.mxu0 0.0
          %v1150 = vand.u32 %v743, 4294901760
          %1151 = vmatpush1.msra.mxu0 %v1150
          %1152 = vmatprep.subr.mxu0 0.0
          %v1153 = vand.u32 %v742, 4294901760
          %1154 = vmatpush1.msra.mxu0 %v1153
          %1155 = vmatprep.subr.mxu0 0.0
          %v1156 = vand.u32 %v741, 4294901760
          %1157 = vmatpush1.msra.mxu0 %v1156
          %1158 = vmatprep.subr.mxu0 0.0
          %1159 = vmatpush2.msra.mxu0 0.0
          %1160 = vmatprep.subr.mxu0 0.0
          %1161 = vmatpush2.msra.mxu0 0.0
          %1162 = vmatprep.subr.mxu0 0.0
          %1163 = vmatpush2.msra.mxu0 0.0
          %1164 = vmatprep.subr.mxu0 0.0
          %1165 = vmatpush2.msra.mxu0 0.0
          %1166 = vmatprep.subr.mxu0 0.0
          %1167 = vmatpush2.msra.mxu0 0.0
          %1168 = vmatprep.subr.mxu0 0.0
          %1169 = vmatpush2.msra.mxu0 0.0
          %1170 = vmatprep.subr.mxu0 0.0
          %1171 = vmatpush2.msra.mxu0 0.0
          %1172 = vmatprep.subr.mxu0 0.0
          %1173 = vmatpush2.msra.mxu0 0.0
          %1174 = vmatprep.subr.mxu0 0.0
          %1175 = vmatpush2.msra.mxu0 0.0
          %1176 = vmatprep.subr.mxu0 0.0
          %1177 = vmatpush2.msra.mxu0 0.0
          %1178 = vmatprep.subr.mxu0 0.0
          %1179 = vmatpush2.msra.mxu0 0.0
          %1180 = vmatprep.subr.mxu0 0.0
          %1181 = vmatpush2.msra.mxu0 0.0
          %1182 = vmatprep.subr.mxu0 0.0
          %1183 = vmatpush2.msra.mxu0 0.0
          %1184 = vmatprep.subr.mxu0 0.0
          %1185 = vmatpush2.msra.mxu0 0.0
          %1186 = vmatprep.subr.mxu0 0.0
          %1187 = vmatpush2.msra.mxu0 0.0
          %1188 = vmatprep.subr.mxu0 0.0
          %1189 = vmatpush2.msra.mxu0 0.0
          %1190 = vmatprep.mubr.f32.mxu0 0.0
          %v1191 = vand.u32 %v740, 4294901760
          %v1192 = vsub.f32 %v740, %v1191
          %v1193 = vand.u32 %v1192, 4294901760
          %1194 = vmatmul.mubr.f32.gmra.mxu0 %v1193
          %v1195 = vpop.f32.mrf.mxu0
          %v1196 = vadd.f32 %v1107, %v1195
          %v1197 = vpop.f32.mrf.mxu0
          %1198 = vdwg.mxu0
          %1199 = vmatprep.subr.mxu0 0.0
          %v1200 = vand.u32 %v756, 4294901760
          %v1201 = vsub.f32 %v756, %v1200
          %v1202 = vand.u32 %v1201, 4294901760
          %1203 = vmatpush1.msra.mxu0 %v1202
          %1204 = vmatprep.subr.mxu0 0.0
          %v1205 = vand.u32 %v755, 4294901760
          %v1206 = vsub.f32 %v755, %v1205
          %v1207 = vand.u32 %v1206, 4294901760
          %1208 = vmatpush1.msra.mxu0 %v1207
          %1209 = vmatprep.subr.mxu0 0.0
          %v1210 = vand.u32 %v754, 4294901760
          %v1211 = vsub.f32 %v754, %v1210
          %v1212 = vand.u32 %v1211, 4294901760
          %1213 = vmatpush1.msra.mxu0 %v1212
          %1214 = vmatprep.subr.mxu0 0.0
          %v1215 = vand.u32 %v753, 4294901760
          %v1216 = vsub.f32 %v753, %v1215
          %v1217 = vand.u32 %v1216, 4294901760
          %1218 = vmatpush1.msra.mxu0 %v1217
          %1219 = vmatprep.subr.mxu0 0.0
          %v1220 = vand.u32 %v752, 4294901760
          %v1221 = vsub.f32 %v752, %v1220
          %v1222 = vand.u32 %v1221, 4294901760
          %1223 = vmatpush1.msra.mxu0 %v1222
          %1224 = vmatprep.subr.mxu0 0.0
          %v1225 = vand.u32 %v751, 4294901760
          %v1226 = vsub.f32 %v751, %v1225
          %v1227 = vand.u32 %v1226, 4294901760
          %1228 = vmatpush1.msra.mxu0 %v1227
          %1229 = vmatprep.subr.mxu0 0.0
          %v1230 = vand.u32 %v750, 4294901760
          %v1231 = vsub.f32 %v750, %v1230
          %v1232 = vand.u32 %v1231, 4294901760
          %1233 = vmatpush1.msra.mxu0 %v1232
          %1234 = vmatprep.subr.mxu0 0.0
          %v1235 = vand.u32 %v749, 4294901760
          %v1236 = vsub.f32 %v749, %v1235
          %v1237 = vand.u32 %v1236, 4294901760
          %1238 = vmatpush1.msra.mxu0 %v1237
          %1239 = vmatprep.subr.mxu0 0.0
          %v1240 = vand.u32 %v748, 4294901760
          %v1241 = vsub.f32 %v748, %v1240
          %v1242 = vand.u32 %v1241, 4294901760
          %1243 = vmatpush1.msra.mxu0 %v1242
          %1244 = vmatprep.subr.mxu0 0.0
          %v1245 = vand.u32 %v747, 4294901760
          %v1246 = vsub.f32 %v747, %v1245
          %v1247 = vand.u32 %v1246, 4294901760
          %1248 = vmatpush1.msra.mxu0 %v1247
          %1249 = vmatprep.subr.mxu0 0.0
          %v1250 = vand.u32 %v746, 4294901760
          %v1251 = vsub.f32 %v746, %v1250
          %v1252 = vand.u32 %v1251, 4294901760
          %1253 = vmatpush1.msra.mxu0 %v1252
          %1254 = vmatprep.subr.mxu0 0.0
          %v1255 = vand.u32 %v745, 4294901760
          %v1256 = vsub.f32 %v745, %v1255
          %v1257 = vand.u32 %v1256, 4294901760
          %1258 = vmatpush1.msra.mxu0 %v1257
          %1259 = vmatprep.subr.mxu0 0.0
          %v1260 = vand.u32 %v744, 4294901760
          %v1261 = vsub.f32 %v744, %v1260
          %v1262 = vand.u32 %v1261, 4294901760
          %1263 = vmatpush1.msra.mxu0 %v1262
          %1264 = vmatprep.subr.mxu0 0.0
          %v1265 = vand.u32 %v743, 4294901760
          %v1266 = vsub.f32 %v743, %v1265
          %v1267 = vand.u32 %v1266, 4294901760
          %1268 = vmatpush1.msra.mxu0 %v1267
          %1269 = vmatprep.subr.mxu0 0.0
          %v1270 = vand.u32 %v742, 4294901760
          %v1271 = vsub.f32 %v742, %v1270
          %v1272 = vand.u32 %v1271, 4294901760
          %1273 = vmatpush1.msra.mxu0 %v1272
          %1274 = vmatprep.subr.mxu0 0.0
          %v1275 = vand.u32 %v741, 4294901760
          %v1276 = vsub.f32 %v741, %v1275
          %v1277 = vand.u32 %v1276, 4294901760
          %1278 = vmatpush1.msra.mxu0 %v1277
          %1279 = vmatprep.subr.mxu0 0.0
          %1280 = vmatpush2.msra.mxu0 0.0
          %1281 = vmatprep.subr.mxu0 0.0
          %1282 = vmatpush2.msra.mxu0 0.0
          %1283 = vmatprep.subr.mxu0 0.0
          %1284 = vmatpush2.msra.mxu0 0.0
          %1285 = vmatprep.subr.mxu0 0.0
          %1286 = vmatpush2.msra.mxu0 0.0
          %1287 = vmatprep.subr.mxu0 0.0
          %1288 = vmatpush2.msra.mxu0 0.0
          %1289 = vmatprep.subr.mxu0 0.0
          %1290 = vmatpush2.msra.mxu0 0.0
          %1291 = vmatprep.subr.mxu0 0.0
          %1292 = vmatpush2.msra.mxu0 0.0
          %1293 = vmatprep.subr.mxu0 0.0
          %1294 = vmatpush2.msra.mxu0 0.0
          %1295 = vmatprep.subr.mxu0 0.0
          %1296 = vmatpush2.msra.mxu0 0.0
          %1297 = vmatprep.subr.mxu0 0.0
          %1298 = vmatpush2.msra.mxu0 0.0
          %1299 = vmatprep.subr.mxu0 0.0
          %1300 = vmatpush2.msra.mxu0 0.0
          %1301 = vmatprep.subr.mxu0 0.0
          %1302 = vmatpush2.msra.mxu0 0.0
          %1303 = vmatprep.subr.mxu0 0.0
          %1304 = vmatpush2.msra.mxu0 0.0
          %1305 = vmatprep.subr.mxu0 0.0
          %1306 = vmatpush2.msra.mxu0 0.0
          %1307 = vmatprep.subr.mxu0 0.0
          %1308 = vmatpush2.msra.mxu0 0.0
          %1309 = vmatprep.subr.mxu0 0.0
          %1310 = vmatpush2.msra.mxu0 0.0
          %1311 = vmatprep.mubr.f32.mxu0 0.0
          %v1312 = vand.u32 %v740, 4294901760
          %1313 = vmatmul.mubr.f32.gmra.mxu0 %v1312
          %v1314 = vpop.f32.mrf.mxu0
          %v1315 = vadd.f32 %v1196, %v1314
          %v1316 = vpop.f32.mrf.mxu0
          %1317 = vdwg.mxu0
          %1318 = vmatprep.subr.mxu0 0.0
          %v1319 = vand.u32 %v756, 4294901760
          %1320 = vmatpush1.msra.mxu0 %v1319
          %1321 = vmatprep.subr.mxu0 0.0
          %v1322 = vand.u32 %v755, 4294901760
          %1323 = vmatpush1.msra.mxu0 %v1322
          %1324 = vmatprep.subr.mxu0 0.0
          %v1325 = vand.u32 %v754, 4294901760
          %1326 = vmatpush1.msra.mxu0 %v1325
          %1327 = vmatprep.subr.mxu0 0.0
          %v1328 = vand.u32 %v753, 4294901760
          %1329 = vmatpush1.msra.mxu0 %v1328
          %1330 = vmatprep.subr.mxu0 0.0
          %v1331 = vand.u32 %v752, 4294901760
          %1332 = vmatpush1.msra.mxu0 %v1331
          %1333 = vmatprep.subr.mxu0 0.0
          %v1334 = vand.u32 %v751, 4294901760
          %1335 = vmatpush1.msra.mxu0 %v1334
          %1336 = vmatprep.subr.mxu0 0.0
          %v1337 = vand.u32 %v750, 4294901760
          %1338 = vmatpush1.msra.mxu0 %v1337
          %1339 = vmatprep.subr.mxu0 0.0
          %v1340 = vand.u32 %v749, 4294901760
          %1341 = vmatpush1.msra.mxu0 %v1340
          %1342 = vmatprep.subr.mxu0 0.0
          %v1343 = vand.u32 %v748, 4294901760
          %1344 = vmatpush1.msra.mxu0 %v1343
          %1345 = vmatprep.subr.mxu0 0.0
          %v1346 = vand.u32 %v747, 4294901760
          %1347 = vmatpush1.msra.mxu0 %v1346
          %1348 = vmatprep.subr.mxu0 0.0
          %v1349 = vand.u32 %v746, 4294901760
          %1350 = vmatpush1.msra.mxu0 %v1349
          %1351 = vmatprep.subr.mxu0 0.0
          %v1352 = vand.u32 %v745, 4294901760
          %1353 = vmatpush1.msra.mxu0 %v1352
          %1354 = vmatprep.subr.mxu0 0.0
          %v1355 = vand.u32 %v744, 4294901760
          %1356 = vmatpush1.msra.mxu0 %v1355
          %1357 = vmatprep.subr.mxu0 0.0
          %v1358 = vand.u32 %v743, 4294901760
          %1359 = vmatpush1.msra.mxu0 %v1358
          %1360 = vmatprep.subr.mxu0 0.0
          %v1361 = vand.u32 %v742, 4294901760
          %1362 = vmatpush1.msra.mxu0 %v1361
          %1363 = vmatprep.subr.mxu0 0.0
          %v1364 = vand.u32 %v741, 4294901760
          %1365 = vmatpush1.msra.mxu0 %v1364
          %1366 = vmatprep.subr.mxu0 0.0
          %1367 = vmatpush2.msra.mxu0 0.0
          %1368 = vmatprep.subr.mxu0 0.0
          %1369 = vmatpush2.msra.mxu0 0.0
          %1370 = vmatprep.subr.mxu0 0.0
          %1371 = vmatpush2.msra.mxu0 0.0
          %1372 = vmatprep.subr.mxu0 0.0
          %1373 = vmatpush2.msra.mxu0 0.0
          %1374 = vmatprep.subr.mxu0 0.0
          %1375 = vmatpush2.msra.mxu0 0.0
          %1376 = vmatprep.subr.mxu0 0.0
          %1377 = vmatpush2.msra.mxu0 0.0
          %1378 = vmatprep.subr.mxu0 0.0
          %1379 = vmatpush2.msra.mxu0 0.0
          %1380 = vmatprep.subr.mxu0 0.0
          %1381 = vmatpush2.msra.mxu0 0.0
          %1382 = vmatprep.subr.mxu0 0.0
          %1383 = vmatpush2.msra.mxu0 0.0
          %1384 = vmatprep.subr.mxu0 0.0
          %1385 = vmatpush2.msra.mxu0 0.0
          %1386 = vmatprep.subr.mxu0 0.0
          %1387 = vmatpush2.msra.mxu0 0.0
          %1388 = vmatprep.subr.mxu0 0.0
          %1389 = vmatpush2.msra.mxu0 0.0
          %1390 = vmatprep.subr.mxu0 0.0
          %1391 = vmatpush2.msra.mxu0 0.0
          %1392 = vmatprep.subr.mxu0 0.0
          %1393 = vmatpush2.msra.mxu0 0.0
          %1394 = vmatprep.subr.mxu0 0.0
          %1395 = vmatpush2.msra.mxu0 0.0
          %1396 = vmatprep.subr.mxu0 0.0
          %1397 = vmatpush2.msra.mxu0 0.0
          %1398 = vmatprep.mubr.f32.mxu0 0.0
          %v1399 = vand.u32 %v740, 4294901760
          %1400 = vmatmul.mubr.f32.gmra.mxu0 %v1399
          %v1401 = vpop.f32.mrf.mxu0
          %v1402 = vadd.f32 %v1315, %v1401
          %v1403 = vpop.f32.mrf.mxu0
          %1404 = vdwg.mxu0
          %v1405 = vtanh.pop %v1402
          %v1406 = vmul.f32 %v1405, %v1405
          %1407 = vadd.xlane.f32.xlu0 %v1406
          %v1408 = vpop.xlane.xlu0 %1407
          %v1409 = vmax.f32 %v1408, 1e-24
          %v1410 = vrsqrt.pop %v1409
          %v1411 = vmul.f32 %v1405, %v1410
          %1412 = vst [vmem:[%s285] sm:$0xff] %v1411
        $region52: #{tpu_custom_call.1} parent=35 // pred_fallthru
          _
        %s1413 = sand.u32 %s138, 1
        %s1414 = scalar_lea.sflag [#allocation5], %s1413
        %s1415 = sand.u32 %s138, 1
        %s1416 = smul.addr %s1415, 8
        %s1417 = scalar_lea.vmem [#allocation8], %s1416
        // Predicated region
        $region53: #{tpu_custom_call.1} parent=35 // pred_check
          %p1418 = pneg %p148
        $region54: #{tpu_custom_call.1} parent=35 // pred_check_branch
          %1420 = sbr.rel (%p1418) target = $region56
        $region55: #{tpu_custom_call.1} parent=35 // pred_region
          %s1422 = ssub.s32 128, 128
          %1423 = vsyncadd %s1414, %s1422
          %s1424 = smul.addr %s26, 128
          %s1425 = scalar_lea.hbm %s4, %s1424
          %s1427 = sshll.u32 %s1417, 4
          %s1428 = int_to_ptr.vmem [resolvable:$true] %s1427
          %1430 = dma.vmem_to_hbm [thread:$0]  %s1428, 128, %s1425, %s1414
        $region56: #{tpu_custom_call.1} parent=35 // pred_fallthru
          _
      $region36: #{tpu_custom_call.1} parent=5 // pred_fallthru
        _
      %p1431 = scmp.le.s32.totalorder 2, %s17
      // Predicated region
      $region57: #{tpu_custom_call.1} parent=5 // pred_check
        %p1432 = pneg %p1431
      $region58: #{tpu_custom_call.1} parent=5 // pred_check_branch
        %1434 = sbr.rel (%p1432) target = $region60
      $region59: #{tpu_custom_call.1} parent=5 // pred_region
        %s1435 = ssub.s32 %s17, 2
        // Predicated region
        $region61: #{tpu_custom_call.1} parent=59 // pred_check
          %p1436 = pneg %p154
        $region62: #{tpu_custom_call.1} parent=59 // pred_check_branch
          %1438 = sbr.rel (%p1436) target = $region64
        $region63: #{tpu_custom_call.1} parent=59 // pred_region
          %s1439 = sand.u32 %s139, 1
          %s1440 = scalar_lea.sflag [#allocation5], %s1439
          %s1441 = sand.u32 %s139, 1
          %s1442 = smul.addr %s1441, 8
          %s1443 = scalar_lea.vmem [#allocation8], %s1442
          %1444 = dma.done %s1440, 128
        $region64: #{tpu_custom_call.1} parent=59 // pred_fallthru
          _
      $region60: #{tpu_custom_call.1} parent=5 // pred_fallthru
        _
    $region6: #{tpu_custom_call.1} parent=1 // loop_footer
      %s21 = sadd.s32 1, %s17
    $region7: #{tpu_custom_call.1} parent=1 // loop_footer_branch
      %16 = sbr.rel target = $region3
    $region8: #{tpu_custom_call.1} parent=1 // loop_exit
      _
    %1445 = vsyncpa [#allocation4], 1
    %s1446 = scalar_lea.sflag [#allocation4], 1
    %1447 = vsyncpa %s1446, 1
    %1448 = vsyncpa [#allocation7], 1
    %1449 = vsyncpa [#allocation5], 1
    %s1450 = scalar_lea.sflag [#allocation5], 1
    %1451 = vsyncpa %s1450, 1

</llo_original>
